<compile_context>
chip_gen: v7x
topology: tpu7x:2x2x1
jax: 0.10.0
libtpu: 0.0.40
codegen_flags: <defaults>
</compile_context>

<pallas_src>
import jax
import jax.numpy as jnp
from jax import lax
from jax.experimental import pallas as pl
from jax.experimental.pallas import tpu as pltpu


LANES = 128  # vreg lane width on all current TPU generations
             # (256 would additionally fill the wider v6e/v7x MXU at the cost
             #  of a sparser block-diagonal weight; 128 is the safe default).


# ----------------------------- in-kernel helpers -----------------------------

def _bn_train(z, gamma, beta, eps=1e-5):
    """BatchNorm1d (train mode) on channels-last z: (B, L, C); gamma/beta (1, C).

    Two-pass batch statistics (mean, then E[(x-mean)^2]) for numerical
    robustness; the centred slab `d` is reused for the output so the result is
    d * (rsqrt(var+eps)*gamma) + beta (folded affine, one full-slab op fewer
    than (z-mean)*scale + beta recomputed from z)."""
    n = z.shape[0] * z.shape[1]
    mean = jnp.sum(z, axis=(0, 1), keepdims=True) * (1.0 / n)
    d = z - mean
    var = jnp.sum(d * d, axis=(0, 1), keepdims=True) * (1.0 / n)
    return d * (lax.rsqrt(var + eps) * gamma) + beta


def _mm(a, w):
    """(B, L, Cin) x (Cin, Cout) -> (B, L, Cout) f32 via a single MXU matmul."""
    B, L, Cin = a.shape
    r = jnp.dot(a.reshape(B * L, Cin), w, preferred_element_type=jnp.float32)
    return r.reshape(B, L, w.shape[-1])


# ------------------------------- path kernel ---------------------------------
# One grid step == one pack of `gp` GMM groups (channels packed on lanes).

def path_kernel(x_ref, w0_ref, g0_ref, b0_ref, wblk_ref, gblk_ref, bblk_ref,
                gcat_ref, bcat_ref, out_ref):
    mm_dt = wblk_ref.dtype                      # MXU operand dtype (bf16)
    layer_num = out_ref.shape[1]
    B = x_ref.shape[1]
    L = x_ref.shape[2]
    Cp = out_ref.shape[-1]                      # packed channels (gp * group_dim)

    x = x_ref[0]                                # (B, L, Cin_p), already bf16

    # conv0 (kernel_size=1) -> bn0 -> relu
    h = _mm(x, w0_ref[0])                       # f32 (B, L, Cp)
    h = _bn_train(h, g0_ref[0], b0_ref[0])
    h = jnp.maximum(h, 0.0)

    # Hoisted once: zero boundary row shared by every k=3 conv tap shift.
    zero_row = jnp.zeros((B, 1, Cp), mm_dt)

    def conv3(z, conv_idx):
        """Conv1d(k=3, pad=1, bias=False) as 3 per-tap MXU matmuls accumulated
        in f32.  Taps are built in bf16 (single cast of z) as shifted copies
        with the zero padding baked in: no lane-axis concat, no 3x-wide slab,
        no mask multiplies.  Weights are ref-indexed per conv/tap (works with
        both static and fori_loop layer indices)."""
        zt = z.astype(mm_dt)
        z_prev = jnp.concatenate([zero_row, zt[:, :L - 1, :]], axis=1)  # x[l-1]
        z_next = jnp.concatenate([zt[:, 1:, :], zero_row], axis=1)      # x[l+1]
        acc = _mm(z_prev, wblk_ref[0, conv_idx, 0])
        acc = acc + _mm(zt, wblk_ref[0, conv_idx, 1])
        acc = acc + _mm(z_next, wblk_ref[0, conv_idx, 2])
        return acc

    def layer_body(li, h):
        identity = h
        # conv1 -> bn1 -> relu
        o = conv3(h, 2 * li)
        o = _bn_train(o, gblk_ref[0, 2 * li], bblk_ref[0, 2 * li])
        o = jnp.maximum(o, 0.0)
        # conv2 -> bn2
        o = conv3(o, 2 * li + 1)
        o = _bn_train(o, gblk_ref[0, 2 * li + 1], bblk_ref[0, 2 * li + 1])
        # residual + relu
        h = jnp.maximum(o + identity, 0.0)
        # concat-BN slice for this layer -> AdaptiveMaxPool1d(1); lane-dense
        # pooled features go to HBM, the classifier runs in the wrapper.
        z = _bn_train(h, gcat_ref[0, li], bcat_ref[0, li])
        out_ref[0, li] = jnp.max(z, axis=1)     # (B, Cp) f32
        return h

    if layer_num <= 3:
        # Short stacks: static unroll (best LLO scheduling visibility).
        for li in range(layer_num):
            h = layer_body(li, h)
    else:
        # Deep stacks: fori_loop bounds vreg live ranges (avoids spills,
        # tighter headroom on v7x); per-layer params use dynamic leading-axis
        # ref indexing.
        lax.fori_loop(0, layer_num, layer_body, h)


# --------------------------------- wrapper ------------------------------------

def group_gmm_resnet_forward(x, params, lanes=LANES):
    """x: (B, gmm_size, L) float32 — NCW as in PyTorch (post-GMMLayer)."""
    G = params["group_num"]
    Cout = params["group_dim"]
    Ln = params["layer_num"]
    mm_dt = params["conv_dtype"]
    B, Ctot, L = x.shape
    assert Ctot % G == 0
    Cin = Ctot // G

    # ---- group packing: fill the 128-lane vreg / MXU N dimension ----
    gp = max(1, min(G, lanes // max(1, Cout)))
    S = -(-G // gp)
    if G >= 2 and S < 2:
        gp = -(-G // 2)          # keep >=2 grid steps so v7x uses both TCs
        S = -(-G // gp)
    Gpad = S * gp
    Cp, Cpin = gp * Cout, gp * Cin
    # NOTE: best MXU/store efficiency when B*L is a multiple of 8 (sublane
    # tile); L is not zero-padded here because that would change BN/max-pool
    # batch statistics.

    def pad_g(a):                # pad group axis 0 from G to Gpad (zeros)
        return jnp.pad(a, ((0, Gpad - G),) + ((0, 0),) * (a.ndim - 1))

    # torch.chunk(x, G, dim=1) -> packed channels-last slabs (S, B, L, gp*Cin);
    # the cast to the matmul dtype rides in the same XLA copy.
    xg = jnp.transpose(x.reshape(B, G, Cin, L), (1, 0, 3, 2))       # (G,B,L,Cin)
    xg = pad_g(xg).reshape(S, gp, B, L, Cin)
    xg = jnp.transpose(xg, (0, 2, 3, 1, 4)).reshape(S, B, L, Cpin).astype(mm_dt)

    eye = jnp.eye(gp, dtype=jnp.float32)

    # conv0 (k=1): per-group (Cin, Cout) -> block-diagonal (S, gp*Cin, gp*Cout)
    w0 = pad_g(params["w0"]).reshape(S, gp, Cin, Cout)
    w0 = jnp.einsum("sgab,gh->sgahb", w0, eye).reshape(S, Cpin, Cp).astype(mm_dt)

    # block convs: per-group per-conv per-tap (Cout, Cout) -> (S, 2*Ln, 3, Cp, Cp)
    wb = pad_g(params["wblk"]).reshape(S, gp, 2 * Ln, 3, Cout, Cout)
    wb = jnp.einsum("sgckab,gh->sckgahb", wb, eye)
    wb = wb.reshape(S, 2 * Ln, 3, Cp, Cp).astype(mm_dt)

    # BN affines packed on the lane axis; trailing (1, Cp) so the kernel can
    # index layers on a *leading* axis even with a dynamic fori_loop index.
    def pack_bn(a):              # (G, Cout) -> (S, 1, Cp)
        return pad_g(a).reshape(S, 1, Cp)

    def pack_bn2(a):             # (G, M, Cout) -> (S, M, 1, Cp)
        M = a.shape[1]
        a = pad_g(a).reshape(S, gp, M, Cout)
        return jnp.transpose(a, (0, 2, 1, 3)).reshape(S, M, 1, Cp)

    g0, b0 = pack_bn(params["g0"]), pack_bn(params["b0"])
    gblk, bblk = pack_bn2(params["gblk"]), pack_bn2(params["bblk"])
    gcat, bcat = pack_bn2(params["gcat"]), pack_bn2(params["bcat"])

    # ---- chip-aware VMEM budget (review item: no hard 32 MiB cap) ----
    itemsize = jnp.dtype(mm_dt).itemsize
    blk_bytes = (B * L * Cpin * itemsize                # input slab
                 + Cpin * Cp * itemsize                 # conv0 weight
                 + 2 * Ln * 3 * Cp * Cp * itemsize      # block conv weights
                 + 4 * (2 + 6 * Ln) * Cp                # BN affines
                 + 4 * Ln * B * Cp)                     # pooled output block
    act_bytes = 4 * 10 * B * L * Cp                     # live activation slabs
    need = 3 * blk_bytes + act_bytes
    try:
        cap = int(pltpu.get_tpu_info().vmem_capacity_bytes)
    except Exception:
        cap = 64 * 1024 * 1024                          # conservative (v7x/TC)
    vmem_limit = int(min(int(0.8 * cap), max(32 * 1024 * 1024, need)))
    # TODO(synk): add an L-tiled variant (2nd "arbitrary" grid axis, BN stats
    # carried in VMEM scratch, 1-row halo for the k=3 convs) for configs whose
    # per-step slabs exceed the v7x per-core VMEM budget.

    x_spec = pl.BlockSpec((1, B, L, Cpin), lambda s: (s, 0, 0, 0))
    if S >= 3:
        # Deeper input buffering hides the per-step slab DMA when compute per
        # step is short (small Cout); only meaningful with >=3 grid steps.
        x_spec = pl.BlockSpec((1, B, L, Cpin), lambda s: (s, 0, 0, 0),
                              pipeline_mode=pl.Buffered(3))

    pooled = pl.pallas_call(
        path_kernel,
        out_shape=jax.ShapeDtypeStruct((S, Ln, B, Cp), jnp.float32),
        grid_spec=pltpu.PrefetchScalarGridSpec(
            num_scalar_prefetch=0,
            grid=(S,),
            in_specs=[
                x_spec,
                pl.BlockSpec((1, Cpin, Cp), lambda s: (s, 0, 0)),
                pl.BlockSpec((1, 1, Cp), lambda s: (s, 0, 0)),
                pl.BlockSpec((1, 1, Cp), lambda s: (s, 0, 0)),
                pl.BlockSpec((1, 2 * Ln, 3, Cp, Cp), lambda s: (s, 0, 0, 0, 0)),
                pl.BlockSpec((1, 2 * Ln, 1, Cp), lambda s: (s, 0, 0, 0)),
                pl.BlockSpec((1, 2 * Ln, 1, Cp), lambda s: (s, 0, 0, 0)),
                pl.BlockSpec((1, Ln, 1, Cp), lambda s: (s, 0, 0, 0)),
                pl.BlockSpec((1, Ln, 1, Cp), lambda s: (s, 0, 0, 0)),
            ],
            out_specs=pl.BlockSpec((1, Ln, B, Cp), lambda s: (s, 0, 0, 0)),
        ),
        compiler_params=pltpu.CompilerParams(
            dimension_semantics=("parallel",),
            vmem_limit_bytes=vmem_limit,
        ),
    )(xg, w0, g0, b0, wb, gblk, bblk, gcat, bcat)

    # Classifier in the wrapper: one lane-dense XLA dot over all features.
    # Feature order matches torch: group outer, then layer, then channel.
    feats = pooled.reshape(S, Ln, B, gp, Cout)
    feats = jnp.transpose(feats, (2, 0, 3, 1, 4)).reshape(B, Gpad, Ln * Cout)
    feats = feats[:, :G, :].reshape(B, G * Ln * Cout)
    return feats @ params["wc"] + params["bc"]


def init_params(key, group_num, group_dim, cin_per_group, layer_num,
                conv_dtype=jnp.bfloat16):
    """Per-group parameters in pre-transposed layouts.

      w0[g, ci, co]              == torch paths[g].conv0.weight[co, ci, 0]
      wblk[g, 2*li+c, k, ci, co] == torch paths[g].blocks[li].conv{c+1}.weight[co, ci, k]
      wc[g*Ln*Cout + li*Cout + co, o] == torch classifier.weight[o, same index]

    conv_dtype is the MXU operand dtype (weights + taps, bf16 = full MXU rate
    on v6e/v7x, valid on v5e); BN / residual / pooling / classifier stay f32.
    """
    G, Cout, Cin, Ln = group_num, group_dim, cin_per_group, layer_num
    k0, k1, k2, k3 = jax.random.split(key, 4)
    return {
        "group_num": G, "group_dim": Cout, "layer_num": Ln,
        "conv_dtype": conv_dtype,
        "w0": 0.3 * jax.random.normal(k0, (G, Cin, Cout), jnp.float32),
        "g0": jnp.ones((G, Cout), jnp.float32),
        "b0": jnp.zeros((G, Cout), jnp.float32),
        "wblk": 0.2 * jax.random.normal(k1, (G, 2 * Ln, 3, Cout, Cout),
                                        jnp.float32),
        "gblk": jnp.ones((G, 2 * Ln, Cout), jnp.float32),
        "bblk": jnp.zeros((G, 2 * Ln, Cout), jnp.float32),
        "gcat": jnp.ones((G, Ln, Cout), jnp.float32),
        "bcat": jnp.zeros((G, Ln, Cout), jnp.float32),
        "wc": 0.1 * jax.random.normal(k2, (G * Ln * Cout, 2), jnp.float32),
        "bc": 0.1 * jax.random.normal(k3, (2,), jnp.float32),
    }


if __name__ == "__main__":
    key = jax.random.PRNGKey(0)
    kx1, kp1, kx2, kp2 = jax.random.split(key, 4)
    B, L = 2, 16

    # Config A: layer_num <= 3 -> statically unrolled layer loop; 2 groups
    # packed per grid step (2 "parallel" steps total).
    G, Cout, Cin, Ln = 4, 8, 8, 2
    pA = init_params(kp1, G, Cout, Cin, Ln)
    xA = jax.random.normal(kx1, (B, G * Cin, L), jnp.float32)   # NCW
    outA = group_gmm_resnet_forward(xA, pA)
    jax.block_until_ready(outA)
    assert outA.shape == (B, 2) and outA.dtype == jnp.float32
    assert bool(jnp.all(jnp.isfinite(outA)))

    # Config B: layer_num > 3 -> fori_loop layer path (dynamic ref indexing).
    G2, Cout2, Cin2, Ln2 = 2, 8, 4, 4
    pB = init_params(kp2, G2, Cout2, Cin2, Ln2)
    xB = jax.random.normal(kx2, (B, G2 * Cin2, L), jnp.float32)
    outB = group_gmm_resnet_forward(xB, pB)
    jax.block_until_ready(outB)
    assert outB.shape == (B, 2)
    assert bool(jnp.all(jnp.isfinite(outB)))

    print("KERNEL_OK")
</pallas_src>

<mosaic_0001>
module attributes {stable_mosaic.version = 11 : i64} {
  func.func @path_kernel(%arg0: i32, %arg1: memref<1x2x16x16xbf16, #tpu.memory_space<vmem>>, %arg2: memref<1x16x16xbf16, #tpu.memory_space<vmem>>, %arg3: memref<1x1x16xf32, #tpu.memory_space<vmem>>, %arg4: memref<1x1x16xf32, #tpu.memory_space<vmem>>, %arg5: memref<1x4x3x16x16xbf16, #tpu.memory_space<vmem>>, %arg6: memref<1x4x1x16xf32, #tpu.memory_space<vmem>>, %arg7: memref<1x4x1x16xf32, #tpu.memory_space<vmem>>, %arg8: memref<1x2x1x16xf32, #tpu.memory_space<vmem>>, %arg9: memref<1x2x1x16xf32, #tpu.memory_space<vmem>>, %arg10: memref<1x2x2x16xf32, #tpu.memory_space<vmem>>) attributes {dimension_semantics = [#tpu.dimension_semantics<parallel>], iteration_bounds = array<i64: 2>, scalar_prefetch = 0 : i64, scratch_operands = 0 : i64, tpu.core_type = #tpu.core_type<tc>, window_params = [{transform_indices = @transform_0, window_bounds = array<i64: 1, 2, 16, 16>}, {transform_indices = @transform_1, window_bounds = array<i64: 1, 16, 16>}, {transform_indices = @transform_2, window_bounds = array<i64: 1, 1, 16>}, {transform_indices = @transform_3, window_bounds = array<i64: 1, 1, 16>}, {transform_indices = @transform_4, window_bounds = array<i64: 1, 4, 3, 16, 16>}, {transform_indices = @transform_5, window_bounds = array<i64: 1, 4, 1, 16>}, {transform_indices = @transform_6, window_bounds = array<i64: 1, 4, 1, 16>}, {transform_indices = @transform_7, window_bounds = array<i64: 1, 2, 1, 16>}, {transform_indices = @transform_8, window_bounds = array<i64: 1, 2, 1, 16>}, {transform_indices = @transform_9, window_bounds = array<i64: 1, 2, 2, 16>}]} {
    %c0 = arith.constant 0 : index
    %c0_0 = arith.constant 0 : index
    %c0_1 = arith.constant 0 : index
    %c0_2 = arith.constant 0 : index
    %0 = vector.load %arg1[%c0, %c0_0, %c0_1, %c0_2] : memref<1x2x16x16xbf16, #tpu.memory_space<vmem>>, vector<1x2x16x16xbf16>
    %1 = vector.shape_cast %0 : vector<1x2x16x16xbf16> to vector<2x16x16xbf16>
    %c0_3 = arith.constant 0 : index
    %c0_4 = arith.constant 0 : index
    %c0_5 = arith.constant 0 : index
    %2 = vector.load %arg2[%c0_3, %c0_4, %c0_5] : memref<1x16x16xbf16, #tpu.memory_space<vmem>>, vector<1x16x16xbf16>
    %3 = vector.shape_cast %2 : vector<1x16x16xbf16> to vector<16x16xbf16>
    %4 = vector.shape_cast %1 : vector<2x16x16xbf16> to vector<32x16xbf16>
    %cst = arith.constant dense<0.000000e+00> : vector<32x16xf32>
    %5 = tpu.matmul %4, %3, %cst {dimension_numbers = #tpu.dot_dimension_numbers<[1], [0], [0], [1], [0, 0, 1, 1], [], []>} : vector<32x16xbf16>, vector<16x16xbf16>, vector<32x16xf32> -> vector<32x16xf32>
    %6 = vector.shape_cast %5 : vector<32x16xf32> to vector<2x16x16xf32>
    %c0_6 = arith.constant 0 : index
    %c0_7 = arith.constant 0 : index
    %c0_8 = arith.constant 0 : index
    %7 = vector.load %arg3[%c0_6, %c0_7, %c0_8] : memref<1x1x16xf32, #tpu.memory_space<vmem>>, vector<1x1x16xf32>
    %8 = vector.shape_cast %7 : vector<1x1x16xf32> to vector<1x16xf32>
    %c0_9 = arith.constant 0 : index
    %c0_10 = arith.constant 0 : index
    %c0_11 = arith.constant 0 : index
    %9 = vector.load %arg4[%c0_9, %c0_10, %c0_11] : memref<1x1x16xf32, #tpu.memory_space<vmem>>, vector<1x1x16xf32>
    %10 = vector.shape_cast %9 : vector<1x1x16xf32> to vector<1x16xf32>
    %cst_12 = arith.constant dense<0.000000e+00> : vector<16xf32>
    %11 = vector.multi_reduction <add>, %6, %cst_12 [0, 1] : vector<2x16x16xf32> to vector<16xf32>
    %12 = vector.shape_cast %11 : vector<16xf32> to vector<1x1x16xf32>
    %cst_13 = arith.constant 3.125000e-02 : f32
    %13 = vector.broadcast %cst_13 : f32 to vector<1x1x16xf32>
    %14 = arith.mulf %12, %13 : vector<1x1x16xf32>
    %15 = vector.broadcast %14 : vector<1x1x16xf32> to vector<2x16x16xf32>
    %16 = arith.subf %6, %15 : vector<2x16x16xf32>
    %17 = arith.mulf %16, %16 : vector<2x16x16xf32>
    %cst_14 = arith.constant dense<0.000000e+00> : vector<16xf32>
    %18 = vector.multi_reduction <add>, %17, %cst_14 [0, 1] : vector<2x16x16xf32> to vector<16xf32>
    %19 = vector.shape_cast %18 : vector<16xf32> to vector<1x1x16xf32>
    %cst_15 = arith.constant 3.125000e-02 : f32
    %20 = vector.broadcast %cst_15 : f32 to vector<1x1x16xf32>
    %21 = arith.mulf %19, %20 : vector<1x1x16xf32>
    %cst_16 = arith.constant 9.99999974E-6 : f32
    %22 = vector.broadcast %cst_16 : f32 to vector<1x1x16xf32>
    %23 = arith.addf %21, %22 : vector<1x1x16xf32>
    %24 = math.rsqrt %23 : vector<1x1x16xf32>
    %25 = vector.shape_cast %8 : vector<1x16xf32> to vector<1x1x16xf32>
    %26 = arith.mulf %24, %25 : vector<1x1x16xf32>
    %27 = vector.broadcast %26 : vector<1x1x16xf32> to vector<2x16x16xf32>
    %28 = arith.mulf %16, %27 : vector<2x16x16xf32>
    %29 = vector.shape_cast %10 : vector<1x16xf32> to vector<1x1x16xf32>
    %30 = vector.broadcast %29 : vector<1x1x16xf32> to vector<2x16x16xf32>
    %31 = arith.addf %28, %30 : vector<2x16x16xf32>
    %cst_17 = arith.constant 0.000000e+00 : f32
    %32 = vector.broadcast %cst_17 : f32 to vector<2x16x16xf32>
    %33 = arith.maximumf %31, %32 : vector<2x16x16xf32>
    %cst_18 = arith.constant 0.000000e+00 : bf16
    %34 = vector.broadcast %cst_18 : bf16 to vector<2x1x16xbf16>
    %35 = arith.truncf %33 : vector<2x16x16xf32> to vector<2x16x16xbf16>
    %36 = vector.extract_strided_slice %35 {offsets = [0, 0, 0], sizes = [2, 15, 16], strides = [1, 1, 1]} : vector<2x16x16xbf16> to vector<2x15x16xbf16>
    %37 = tpu.concatenate %34, %36 in 1 : vector<2x1x16xbf16>, vector<2x15x16xbf16> -> vector<2x16x16xbf16>
    %38 = vector.extract_strided_slice %35 {offsets = [0, 1, 0], sizes = [2, 15, 16], strides = [1, 1, 1]} : vector<2x16x16xbf16> to vector<2x15x16xbf16>
    %39 = tpu.concatenate %38, %34 in 1 : vector<2x15x16xbf16>, vector<2x1x16xbf16> -> vector<2x16x16xbf16>
    %c0_19 = arith.constant 0 : index
    %c0_20 = arith.constant 0 : index
    %c0_21 = arith.constant 0 : index
    %c0_22 = arith.constant 0 : index
    %c0_23 = arith.constant 0 : index
    %40 = vector.load %arg5[%c0_19, %c0_20, %c0_21, %c0_22, %c0_23] : memref<1x4x3x16x16xbf16, #tpu.memory_space<vmem>>, vector<1x1x1x16x16xbf16>
    %41 = vector.shape_cast %40 : vector<1x1x1x16x16xbf16> to vector<16x16xbf16>
    %42 = vector.shape_cast %37 : vector<2x16x16xbf16> to vector<32x16xbf16>
    %cst_24 = arith.constant dense<0.000000e+00> : vector<32x16xf32>
    %43 = tpu.matmul %42, %41, %cst_24 {dimension_numbers = #tpu.dot_dimension_numbers<[1], [0], [0], [1], [0, 0, 1, 1], [], []>} : vector<32x16xbf16>, vector<16x16xbf16>, vector<32x16xf32> -> vector<32x16xf32>
    %44 = vector.shape_cast %43 : vector<32x16xf32> to vector<2x16x16xf32>
    %c0_25 = arith.constant 0 : index
    %c0_26 = arith.constant 0 : index
    %c1 = arith.constant 1 : index
    %c0_27 = arith.constant 0 : index
    %c0_28 = arith.constant 0 : index
    %45 = vector.load %arg5[%c0_25, %c0_26, %c1, %c0_27, %c0_28] : memref<1x4x3x16x16xbf16, #tpu.memory_space<vmem>>, vector<1x1x1x16x16xbf16>
    %46 = vector.shape_cast %45 : vector<1x1x1x16x16xbf16> to vector<16x16xbf16>
    %47 = vector.shape_cast %35 : vector<2x16x16xbf16> to vector<32x16xbf16>
    %cst_29 = arith.constant dense<0.000000e+00> : vector<32x16xf32>
    %48 = tpu.matmul %47, %46, %cst_29 {dimension_numbers = #tpu.dot_dimension_numbers<[1], [0], [0], [1], [0, 0, 1, 1], [], []>} : vector<32x16xbf16>, vector<16x16xbf16>, vector<32x16xf32> -> vector<32x16xf32>
    %49 = vector.shape_cast %48 : vector<32x16xf32> to vector<2x16x16xf32>
    %50 = arith.addf %44, %49 : vector<2x16x16xf32>
    %c0_30 = arith.constant 0 : index
    %c0_31 = arith.constant 0 : index
    %c2 = arith.constant 2 : index
    %c0_32 = arith.constant 0 : index
    %c0_33 = arith.constant 0 : index
    %51 = vector.load %arg5[%c0_30, %c0_31, %c2, %c0_32, %c0_33] : memref<1x4x3x16x16xbf16, #tpu.memory_space<vmem>>, vector<1x1x1x16x16xbf16>
    %52 = vector.shape_cast %51 : vector<1x1x1x16x16xbf16> to vector<16x16xbf16>
    %53 = vector.shape_cast %39 : vector<2x16x16xbf16> to vector<32x16xbf16>
    %cst_34 = arith.constant dense<0.000000e+00> : vector<32x16xf32>
    %54 = tpu.matmul %53, %52, %cst_34 {dimension_numbers = #tpu.dot_dimension_numbers<[1], [0], [0], [1], [0, 0, 1, 1], [], []>} : vector<32x16xbf16>, vector<16x16xbf16>, vector<32x16xf32> -> vector<32x16xf32>
    %55 = vector.shape_cast %54 : vector<32x16xf32> to vector<2x16x16xf32>
    %56 = arith.addf %50, %55 : vector<2x16x16xf32>
    %c0_35 = arith.constant 0 : index
    %c0_36 = arith.constant 0 : index
    %c0_37 = arith.constant 0 : index
    %c0_38 = arith.constant 0 : index
    %57 = vector.load %arg6[%c0_35, %c0_36, %c0_37, %c0_38] : memref<1x4x1x16xf32, #tpu.memory_space<vmem>>, vector<1x1x1x16xf32>
    %58 = vector.shape_cast %57 : vector<1x1x1x16xf32> to vector<1x16xf32>
    %c0_39 = arith.constant 0 : index
    %c0_40 = arith.constant 0 : index
    %c0_41 = arith.constant 0 : index
    %c0_42 = arith.constant 0 : index
    %59 = vector.load %arg7[%c0_39, %c0_40, %c0_41, %c0_42] : memref<1x4x1x16xf32, #tpu.memory_space<vmem>>, vector<1x1x1x16xf32>
    %60 = vector.shape_cast %59 : vector<1x1x1x16xf32> to vector<1x16xf32>
    %cst_43 = arith.constant dense<0.000000e+00> : vector<16xf32>
    %61 = vector.multi_reduction <add>, %56, %cst_43 [0, 1] : vector<2x16x16xf32> to vector<16xf32>
    %62 = vector.shape_cast %61 : vector<16xf32> to vector<1x1x16xf32>
    %cst_44 = arith.constant 3.125000e-02 : f32
    %63 = vector.broadcast %cst_44 : f32 to vector<1x1x16xf32>
    %64 = arith.mulf %62, %63 : vector<1x1x16xf32>
    %65 = vector.broadcast %64 : vector<1x1x16xf32> to vector<2x16x16xf32>
    %66 = arith.subf %56, %65 : vector<2x16x16xf32>
    %67 = arith.mulf %66, %66 : vector<2x16x16xf32>
    %cst_45 = arith.constant dense<0.000000e+00> : vector<16xf32>
    %68 = vector.multi_reduction <add>, %67, %cst_45 [0, 1] : vector<2x16x16xf32> to vector<16xf32>
    %69 = vector.shape_cast %68 : vector<16xf32> to vector<1x1x16xf32>
    %cst_46 = arith.constant 3.125000e-02 : f32
    %70 = vector.broadcast %cst_46 : f32 to vector<1x1x16xf32>
    %71 = arith.mulf %69, %70 : vector<1x1x16xf32>
    %cst_47 = arith.constant 9.99999974E-6 : f32
    %72 = vector.broadcast %cst_47 : f32 to vector<1x1x16xf32>
    %73 = arith.addf %71, %72 : vector<1x1x16xf32>
    %74 = math.rsqrt %73 : vector<1x1x16xf32>
    %75 = vector.shape_cast %58 : vector<1x16xf32> to vector<1x1x16xf32>
    %76 = arith.mulf %74, %75 : vector<1x1x16xf32>
    %77 = vector.broadcast %76 : vector<1x1x16xf32> to vector<2x16x16xf32>
    %78 = arith.mulf %66, %77 : vector<2x16x16xf32>
    %79 = vector.shape_cast %60 : vector<1x16xf32> to vector<1x1x16xf32>
    %80 = vector.broadcast %79 : vector<1x1x16xf32> to vector<2x16x16xf32>
    %81 = arith.addf %78, %80 : vector<2x16x16xf32>
    %cst_48 = arith.constant 0.000000e+00 : f32
    %82 = vector.broadcast %cst_48 : f32 to vector<2x16x16xf32>
    %83 = arith.maximumf %81, %82 : vector<2x16x16xf32>
    %84 = arith.truncf %83 : vector<2x16x16xf32> to vector<2x16x16xbf16>
    %85 = vector.extract_strided_slice %84 {offsets = [0, 0, 0], sizes = [2, 15, 16], strides = [1, 1, 1]} : vector<2x16x16xbf16> to vector<2x15x16xbf16>
    %86 = tpu.concatenate %34, %85 in 1 : vector<2x1x16xbf16>, vector<2x15x16xbf16> -> vector<2x16x16xbf16>
    %87 = vector.extract_strided_slice %84 {offsets = [0, 1, 0], sizes = [2, 15, 16], strides = [1, 1, 1]} : vector<2x16x16xbf16> to vector<2x15x16xbf16>
    %88 = tpu.concatenate %87, %34 in 1 : vector<2x15x16xbf16>, vector<2x1x16xbf16> -> vector<2x16x16xbf16>
    %c0_49 = arith.constant 0 : index
    %c1_50 = arith.constant 1 : index
    %c0_51 = arith.constant 0 : index
    %c0_52 = arith.constant 0 : index
    %c0_53 = arith.constant 0 : index
    %89 = vector.load %arg5[%c0_49, %c1_50, %c0_51, %c0_52, %c0_53] : memref<1x4x3x16x16xbf16, #tpu.memory_space<vmem>>, vector<1x1x1x16x16xbf16>
    %90 = vector.shape_cast %89 : vector<1x1x1x16x16xbf16> to vector<16x16xbf16>
    %91 = vector.shape_cast %86 : vector<2x16x16xbf16> to vector<32x16xbf16>
    %cst_54 = arith.constant dense<0.000000e+00> : vector<32x16xf32>
    %92 = tpu.matmul %91, %90, %cst_54 {dimension_numbers = #tpu.dot_dimension_numbers<[1], [0], [0], [1], [0, 0, 1, 1], [], []>} : vector<32x16xbf16>, vector<16x16xbf16>, vector<32x16xf32> -> vector<32x16xf32>
    %93 = vector.shape_cast %92 : vector<32x16xf32> to vector<2x16x16xf32>
    %c0_55 = arith.constant 0 : index
    %c1_56 = arith.constant 1 : index
    %c1_57 = arith.constant 1 : index
    %c0_58 = arith.constant 0 : index
    %c0_59 = arith.constant 0 : index
    %94 = vector.load %arg5[%c0_55, %c1_56, %c1_57, %c0_58, %c0_59] : memref<1x4x3x16x16xbf16, #tpu.memory_space<vmem>>, vector<1x1x1x16x16xbf16>
    %95 = vector.shape_cast %94 : vector<1x1x1x16x16xbf16> to vector<16x16xbf16>
    %96 = vector.shape_cast %84 : vector<2x16x16xbf16> to vector<32x16xbf16>
    %cst_60 = arith.constant dense<0.000000e+00> : vector<32x16xf32>
    %97 = tpu.matmul %96, %95, %cst_60 {dimension_numbers = #tpu.dot_dimension_numbers<[1], [0], [0], [1], [0, 0, 1, 1], [], []>} : vector<32x16xbf16>, vector<16x16xbf16>, vector<32x16xf32> -> vector<32x16xf32>
    %98 = vector.shape_cast %97 : vector<32x16xf32> to vector<2x16x16xf32>
    %99 = arith.addf %93, %98 : vector<2x16x16xf32>
    %c0_61 = arith.constant 0 : index
    %c1_62 = arith.constant 1 : index
    %c2_63 = arith.constant 2 : index
    %c0_64 = arith.constant 0 : index
    %c0_65 = arith.constant 0 : index
    %100 = vector.load %arg5[%c0_61, %c1_62, %c2_63, %c0_64, %c0_65] : memref<1x4x3x16x16xbf16, #tpu.memory_space<vmem>>, vector<1x1x1x16x16xbf16>
    %101 = vector.shape_cast %100 : vector<1x1x1x16x16xbf16> to vector<16x16xbf16>
    %102 = vector.shape_cast %88 : vector<2x16x16xbf16> to vector<32x16xbf16>
    %cst_66 = arith.constant dense<0.000000e+00> : vector<32x16xf32>
    %103 = tpu.matmul %102, %101, %cst_66 {dimension_numbers = #tpu.dot_dimension_numbers<[1], [0], [0], [1], [0, 0, 1, 1], [], []>} : vector<32x16xbf16>, vector<16x16xbf16>, vector<32x16xf32> -> vector<32x16xf32>
    %104 = vector.shape_cast %103 : vector<32x16xf32> to vector<2x16x16xf32>
    %105 = arith.addf %99, %104 : vector<2x16x16xf32>
    %c0_67 = arith.constant 0 : index
    %c1_68 = arith.constant 1 : index
    %c0_69 = arith.constant 0 : index
    %c0_70 = arith.constant 0 : index
    %106 = vector.load %arg6[%c0_67, %c1_68, %c0_69, %c0_70] : memref<1x4x1x16xf32, #tpu.memory_space<vmem>>, vector<1x1x1x16xf32>
    %107 = vector.shape_cast %106 : vector<1x1x1x16xf32> to vector<1x16xf32>
    %c0_71 = arith.constant 0 : index
    %c1_72 = arith.constant 1 : index
    %c0_73 = arith.constant 0 : index
    %c0_74 = arith.constant 0 : index
    %108 = vector.load %arg7[%c0_71, %c1_72, %c0_73, %c0_74] : memref<1x4x1x16xf32, #tpu.memory_space<vmem>>, vector<1x1x1x16xf32>
    %109 = vector.shape_cast %108 : vector<1x1x1x16xf32> to vector<1x16xf32>
    %cst_75 = arith.constant dense<0.000000e+00> : vector<16xf32>
    %110 = vector.multi_reduction <add>, %105, %cst_75 [0, 1] : vector<2x16x16xf32> to vector<16xf32>
    %111 = vector.shape_cast %110 : vector<16xf32> to vector<1x1x16xf32>
    %cst_76 = arith.constant 3.125000e-02 : f32
    %112 = vector.broadcast %cst_76 : f32 to vector<1x1x16xf32>
    %113 = arith.mulf %111, %112 : vector<1x1x16xf32>
    %114 = vector.broadcast %113 : vector<1x1x16xf32> to vector<2x16x16xf32>
    %115 = arith.subf %105, %114 : vector<2x16x16xf32>
    %116 = arith.mulf %115, %115 : vector<2x16x16xf32>
    %cst_77 = arith.constant dense<0.000000e+00> : vector<16xf32>
    %117 = vector.multi_reduction <add>, %116, %cst_77 [0, 1] : vector<2x16x16xf32> to vector<16xf32>
    %118 = vector.shape_cast %117 : vector<16xf32> to vector<1x1x16xf32>
    %cst_78 = arith.constant 3.125000e-02 : f32
    %119 = vector.broadcast %cst_78 : f32 to vector<1x1x16xf32>
    %120 = arith.mulf %118, %119 : vector<1x1x16xf32>
    %cst_79 = arith.constant 9.99999974E-6 : f32
    %121 = vector.broadcast %cst_79 : f32 to vector<1x1x16xf32>
    %122 = arith.addf %120, %121 : vector<1x1x16xf32>
    %123 = math.rsqrt %122 : vector<1x1x16xf32>
    %124 = vector.shape_cast %107 : vector<1x16xf32> to vector<1x1x16xf32>
    %125 = arith.mulf %123, %124 : vector<1x1x16xf32>
    %126 = vector.broadcast %125 : vector<1x1x16xf32> to vector<2x16x16xf32>
    %127 = arith.mulf %115, %126 : vector<2x16x16xf32>
    %128 = vector.shape_cast %109 : vector<1x16xf32> to vector<1x1x16xf32>
    %129 = vector.broadcast %128 : vector<1x1x16xf32> to vector<2x16x16xf32>
    %130 = arith.addf %127, %129 : vector<2x16x16xf32>
    %131 = arith.addf %130, %33 : vector<2x16x16xf32>
    %cst_80 = arith.constant 0.000000e+00 : f32
    %132 = vector.broadcast %cst_80 : f32 to vector<2x16x16xf32>
    %133 = arith.maximumf %131, %132 : vector<2x16x16xf32>
    %c0_81 = arith.constant 0 : index
    %c0_82 = arith.constant 0 : index
    %c0_83 = arith.constant 0 : index
    %c0_84 = arith.constant 0 : index
    %134 = vector.load %arg8[%c0_81, %c0_82, %c0_83, %c0_84] : memref<1x2x1x16xf32, #tpu.memory_space<vmem>>, vector<1x1x1x16xf32>
    %135 = vector.shape_cast %134 : vector<1x1x1x16xf32> to vector<1x16xf32>
    %c0_85 = arith.constant 0 : index
    %c0_86 = arith.constant 0 : index
    %c0_87 = arith.constant 0 : index
    %c0_88 = arith.constant 0 : index
    %136 = vector.load %arg9[%c0_85, %c0_86, %c0_87, %c0_88] : memref<1x2x1x16xf32, #tpu.memory_space<vmem>>, vector<1x1x1x16xf32>
    %137 = vector.shape_cast %136 : vector<1x1x1x16xf32> to vector<1x16xf32>
    %cst_89 = arith.constant dense<0.000000e+00> : vector<16xf32>
    %138 = vector.multi_reduction <add>, %133, %cst_89 [0, 1] : vector<2x16x16xf32> to vector<16xf32>
    %139 = vector.shape_cast %138 : vector<16xf32> to vector<1x1x16xf32>
    %cst_90 = arith.constant 3.125000e-02 : f32
    %140 = vector.broadcast %cst_90 : f32 to vector<1x1x16xf32>
    %141 = arith.mulf %139, %140 : vector<1x1x16xf32>
    %142 = vector.broadcast %141 : vector<1x1x16xf32> to vector<2x16x16xf32>
    %143 = arith.subf %133, %142 : vector<2x16x16xf32>
    %144 = arith.mulf %143, %143 : vector<2x16x16xf32>
    %cst_91 = arith.constant dense<0.000000e+00> : vector<16xf32>
    %145 = vector.multi_reduction <add>, %144, %cst_91 [0, 1] : vector<2x16x16xf32> to vector<16xf32>
    %146 = vector.shape_cast %145 : vector<16xf32> to vector<1x1x16xf32>
    %cst_92 = arith.constant 3.125000e-02 : f32
    %147 = vector.broadcast %cst_92 : f32 to vector<1x1x16xf32>
    %148 = arith.mulf %146, %147 : vector<1x1x16xf32>
    %cst_93 = arith.constant 9.99999974E-6 : f32
    %149 = vector.broadcast %cst_93 : f32 to vector<1x1x16xf32>
    %150 = arith.addf %148, %149 : vector<1x1x16xf32>
    %151 = math.rsqrt %150 : vector<1x1x16xf32>
    %152 = vector.shape_cast %135 : vector<1x16xf32> to vector<1x1x16xf32>
    %153 = arith.mulf %151, %152 : vector<1x1x16xf32>
    %154 = vector.broadcast %153 : vector<1x1x16xf32> to vector<2x16x16xf32>
    %155 = arith.mulf %143, %154 : vector<2x16x16xf32>
    %156 = vector.shape_cast %137 : vector<1x16xf32> to vector<1x1x16xf32>
    %157 = vector.broadcast %156 : vector<1x1x16xf32> to vector<2x16x16xf32>
    %158 = arith.addf %155, %157 : vector<2x16x16xf32>
    %cst_94 = arith.constant dense<0xFF800000> : vector<2x16xf32>
    %159 = vector.multi_reduction <maximumf>, %158, %cst_94 [1] : vector<2x16x16xf32> to vector<2x16xf32>
    %c0_95 = arith.constant 0 : index
    %c0_96 = arith.constant 0 : index
    %c0_97 = arith.constant 0 : index
    %c0_98 = arith.constant 0 : index
    %160 = vector.load %arg10[%c0_95, %c0_96, %c0_97, %c0_98] : memref<1x2x2x16xf32, #tpu.memory_space<vmem>>, vector<1x1x2x16xf32>
    %161 = vector.shape_cast %160 : vector<1x1x2x16xf32> to vector<2x16xf32>
    %162 = vector.shape_cast %159 : vector<2x16xf32> to vector<1x1x2x16xf32>
    tpu.vector_store %arg10[%c0_95, %c0_96, %c0_97, %c0_98], %162 {strides = array<i32>} : memref<1x2x2x16xf32, #tpu.memory_space<vmem>>, vector<1x1x2x16xf32>,
    %163 = arith.truncf %133 : vector<2x16x16xf32> to vector<2x16x16xbf16>
    %164 = vector.extract_strided_slice %163 {offsets = [0, 0, 0], sizes = [2, 15, 16], strides = [1, 1, 1]} : vector<2x16x16xbf16> to vector<2x15x16xbf16>
    %165 = tpu.concatenate %34, %164 in 1 : vector<2x1x16xbf16>, vector<2x15x16xbf16> -> vector<2x16x16xbf16>
    %166 = vector.extract_strided_slice %163 {offsets = [0, 1, 0], sizes = [2, 15, 16], strides = [1, 1, 1]} : vector<2x16x16xbf16> to vector<2x15x16xbf16>
    %167 = tpu.concatenate %166, %34 in 1 : vector<2x15x16xbf16>, vector<2x1x16xbf16> -> vector<2x16x16xbf16>
    %c0_99 = arith.constant 0 : index
    %c2_100 = arith.constant 2 : index
    %c0_101 = arith.constant 0 : index
    %c0_102 = arith.constant 0 : index
    %c0_103 = arith.constant 0 : index
    %168 = vector.load %arg5[%c0_99, %c2_100, %c0_101, %c0_102, %c0_103] : memref<1x4x3x16x16xbf16, #tpu.memory_space<vmem>>, vector<1x1x1x16x16xbf16>
    %169 = vector.shape_cast %168 : vector<1x1x1x16x16xbf16> to vector<16x16xbf16>
    %170 = vector.shape_cast %165 : vector<2x16x16xbf16> to vector<32x16xbf16>
    %cst_104 = arith.constant dense<0.000000e+00> : vector<32x16xf32>
    %171 = tpu.matmul %170, %169, %cst_104 {dimension_numbers = #tpu.dot_dimension_numbers<[1], [0], [0], [1], [0, 0, 1, 1], [], []>} : vector<32x16xbf16>, vector<16x16xbf16>, vector<32x16xf32> -> vector<32x16xf32>
    %172 = vector.shape_cast %171 : vector<32x16xf32> to vector<2x16x16xf32>
    %c0_105 = arith.constant 0 : index
    %c2_106 = arith.constant 2 : index
    %c1_107 = arith.constant 1 : index
    %c0_108 = arith.constant 0 : index
    %c0_109 = arith.constant 0 : index
    %173 = vector.load %arg5[%c0_105, %c2_106, %c1_107, %c0_108, %c0_109] : memref<1x4x3x16x16xbf16, #tpu.memory_space<vmem>>, vector<1x1x1x16x16xbf16>
    %174 = vector.shape_cast %173 : vector<1x1x1x16x16xbf16> to vector<16x16xbf16>
    %175 = vector.shape_cast %163 : vector<2x16x16xbf16> to vector<32x16xbf16>
    %cst_110 = arith.constant dense<0.000000e+00> : vector<32x16xf32>
    %176 = tpu.matmul %175, %174, %cst_110 {dimension_numbers = #tpu.dot_dimension_numbers<[1], [0], [0], [1], [0, 0, 1, 1], [], []>} : vector<32x16xbf16>, vector<16x16xbf16>, vector<32x16xf32> -> vector<32x16xf32>
    %177 = vector.shape_cast %176 : vector<32x16xf32> to vector<2x16x16xf32>
    %178 = arith.addf %172, %177 : vector<2x16x16xf32>
    %c0_111 = arith.constant 0 : index
    %c2_112 = arith.constant 2 : index
    %c2_113 = arith.constant 2 : index
    %c0_114 = arith.constant 0 : index
    %c0_115 = arith.constant 0 : index
    %179 = vector.load %arg5[%c0_111, %c2_112, %c2_113, %c0_114, %c0_115] : memref<1x4x3x16x16xbf16, #tpu.memory_space<vmem>>, vector<1x1x1x16x16xbf16>
    %180 = vector.shape_cast %179 : vector<1x1x1x16x16xbf16> to vector<16x16xbf16>
    %181 = vector.shape_cast %167 : vector<2x16x16xbf16> to vector<32x16xbf16>
    %cst_116 = arith.constant dense<0.000000e+00> : vector<32x16xf32>
    %182 = tpu.matmul %181, %180, %cst_116 {dimension_numbers = #tpu.dot_dimension_numbers<[1], [0], [0], [1], [0, 0, 1, 1], [], []>} : vector<32x16xbf16>, vector<16x16xbf16>, vector<32x16xf32> -> vector<32x16xf32>
    %183 = vector.shape_cast %182 : vector<32x16xf32> to vector<2x16x16xf32>
    %184 = arith.addf %178, %183 : vector<2x16x16xf32>
    %c0_117 = arith.constant 0 : index
    %c2_118 = arith.constant 2 : index
    %c0_119 = arith.constant 0 : index
    %c0_120 = arith.constant 0 : index
    %185 = vector.load %arg6[%c0_117, %c2_118, %c0_119, %c0_120] : memref<1x4x1x16xf32, #tpu.memory_space<vmem>>, vector<1x1x1x16xf32>
    %186 = vector.shape_cast %185 : vector<1x1x1x16xf32> to vector<1x16xf32>
    %c0_121 = arith.constant 0 : index
    %c2_122 = arith.constant 2 : index
    %c0_123 = arith.constant 0 : index
    %c0_124 = arith.constant 0 : index
    %187 = vector.load %arg7[%c0_121, %c2_122, %c0_123, %c0_124] : memref<1x4x1x16xf32, #tpu.memory_space<vmem>>, vector<1x1x1x16xf32>
    %188 = vector.shape_cast %187 : vector<1x1x1x16xf32> to vector<1x16xf32>
    %cst_125 = arith.constant dense<0.000000e+00> : vector<16xf32>
    %189 = vector.multi_reduction <add>, %184, %cst_125 [0, 1] : vector<2x16x16xf32> to vector<16xf32>
    %190 = vector.shape_cast %189 : vector<16xf32> to vector<1x1x16xf32>
    %cst_126 = arith.constant 3.125000e-02 : f32
    %191 = vector.broadcast %cst_126 : f32 to vector<1x1x16xf32>
    %192 = arith.mulf %190, %191 : vector<1x1x16xf32>
    %193 = vector.broadcast %192 : vector<1x1x16xf32> to vector<2x16x16xf32>
    %194 = arith.subf %184, %193 : vector<2x16x16xf32>
    %195 = arith.mulf %194, %194 : vector<2x16x16xf32>
    %cst_127 = arith.constant dense<0.000000e+00> : vector<16xf32>
    %196 = vector.multi_reduction <add>, %195, %cst_127 [0, 1] : vector<2x16x16xf32> to vector<16xf32>
    %197 = vector.shape_cast %196 : vector<16xf32> to vector<1x1x16xf32>
    %cst_128 = arith.constant 3.125000e-02 : f32
    %198 = vector.broadcast %cst_128 : f32 to vector<1x1x16xf32>
    %199 = arith.mulf %197, %198 : vector<1x1x16xf32>
    %cst_129 = arith.constant 9.99999974E-6 : f32
    %200 = vector.broadcast %cst_129 : f32 to vector<1x1x16xf32>
    %201 = arith.addf %199, %200 : vector<1x1x16xf32>
    %202 = math.rsqrt %201 : vector<1x1x16xf32>
    %203 = vector.shape_cast %186 : vector<1x16xf32> to vector<1x1x16xf32>
    %204 = arith.mulf %202, %203 : vector<1x1x16xf32>
    %205 = vector.broadcast %204 : vector<1x1x16xf32> to vector<2x16x16xf32>
    %206 = arith.mulf %194, %205 : vector<2x16x16xf32>
    %207 = vector.shape_cast %188 : vector<1x16xf32> to vector<1x1x16xf32>
    %208 = vector.broadcast %207 : vector<1x1x16xf32> to vector<2x16x16xf32>
    %209 = arith.addf %206, %208 : vector<2x16x16xf32>
    %cst_130 = arith.constant 0.000000e+00 : f32
    %210 = vector.broadcast %cst_130 : f32 to vector<2x16x16xf32>
    %211 = arith.maximumf %209, %210 : vector<2x16x16xf32>
    %212 = arith.truncf %211 : vector<2x16x16xf32> to vector<2x16x16xbf16>
    %213 = vector.extract_strided_slice %212 {offsets = [0, 0, 0], sizes = [2, 15, 16], strides = [1, 1, 1]} : vector<2x16x16xbf16> to vector<2x15x16xbf16>
    %214 = tpu.concatenate %34, %213 in 1 : vector<2x1x16xbf16>, vector<2x15x16xbf16> -> vector<2x16x16xbf16>
    %215 = vector.extract_strided_slice %212 {offsets = [0, 1, 0], sizes = [2, 15, 16], strides = [1, 1, 1]} : vector<2x16x16xbf16> to vector<2x15x16xbf16>
    %216 = tpu.concatenate %215, %34 in 1 : vector<2x15x16xbf16>, vector<2x1x16xbf16> -> vector<2x16x16xbf16>
    %c0_131 = arith.constant 0 : index
    %c3 = arith.constant 3 : index
    %c0_132 = arith.constant 0 : index
    %c0_133 = arith.constant 0 : index
    %c0_134 = arith.constant 0 : index
    %217 = vector.load %arg5[%c0_131, %c3, %c0_132, %c0_133, %c0_134] : memref<1x4x3x16x16xbf16, #tpu.memory_space<vmem>>, vector<1x1x1x16x16xbf16>
    %218 = vector.shape_cast %217 : vector<1x1x1x16x16xbf16> to vector<16x16xbf16>
    %219 = vector.shape_cast %214 : vector<2x16x16xbf16> to vector<32x16xbf16>
    %cst_135 = arith.constant dense<0.000000e+00> : vector<32x16xf32>
    %220 = tpu.matmul %219, %218, %cst_135 {dimension_numbers = #tpu.dot_dimension_numbers<[1], [0], [0], [1], [0, 0, 1, 1], [], []>} : vector<32x16xbf16>, vector<16x16xbf16>, vector<32x16xf32> -> vector<32x16xf32>
    %221 = vector.shape_cast %220 : vector<32x16xf32> to vector<2x16x16xf32>
    %c0_136 = arith.constant 0 : index
    %c3_137 = arith.constant 3 : index
    %c1_138 = arith.constant 1 : index
    %c0_139 = arith.constant 0 : index
    %c0_140 = arith.constant 0 : index
    %222 = vector.load %arg5[%c0_136, %c3_137, %c1_138, %c0_139, %c0_140] : memref<1x4x3x16x16xbf16, #tpu.memory_space<vmem>>, vector<1x1x1x16x16xbf16>
    %223 = vector.shape_cast %222 : vector<1x1x1x16x16xbf16> to vector<16x16xbf16>
    %224 = vector.shape_cast %212 : vector<2x16x16xbf16> to vector<32x16xbf16>
    %cst_141 = arith.constant dense<0.000000e+00> : vector<32x16xf32>
    %225 = tpu.matmul %224, %223, %cst_141 {dimension_numbers = #tpu.dot_dimension_numbers<[1], [0], [0], [1], [0, 0, 1, 1], [], []>} : vector<32x16xbf16>, vector<16x16xbf16>, vector<32x16xf32> -> vector<32x16xf32>
    %226 = vector.shape_cast %225 : vector<32x16xf32> to vector<2x16x16xf32>
    %227 = arith.addf %221, %226 : vector<2x16x16xf32>
    %c0_142 = arith.constant 0 : index
    %c3_143 = arith.constant 3 : index
    %c2_144 = arith.constant 2 : index
    %c0_145 = arith.constant 0 : index
    %c0_146 = arith.constant 0 : index
    %228 = vector.load %arg5[%c0_142, %c3_143, %c2_144, %c0_145, %c0_146] : memref<1x4x3x16x16xbf16, #tpu.memory_space<vmem>>, vector<1x1x1x16x16xbf16>
    %229 = vector.shape_cast %228 : vector<1x1x1x16x16xbf16> to vector<16x16xbf16>
    %230 = vector.shape_cast %216 : vector<2x16x16xbf16> to vector<32x16xbf16>
    %cst_147 = arith.constant dense<0.000000e+00> : vector<32x16xf32>
    %231 = tpu.matmul %230, %229, %cst_147 {dimension_numbers = #tpu.dot_dimension_numbers<[1], [0], [0], [1], [0, 0, 1, 1], [], []>} : vector<32x16xbf16>, vector<16x16xbf16>, vector<32x16xf32> -> vector<32x16xf32>
    %232 = vector.shape_cast %231 : vector<32x16xf32> to vector<2x16x16xf32>
    %233 = arith.addf %227, %232 : vector<2x16x16xf32>
    %c0_148 = arith.constant 0 : index
    %c3_149 = arith.constant 3 : index
    %c0_150 = arith.constant 0 : index
    %c0_151 = arith.constant 0 : index
    %234 = vector.load %arg6[%c0_148, %c3_149, %c0_150, %c0_151] : memref<1x4x1x16xf32, #tpu.memory_space<vmem>>, vector<1x1x1x16xf32>
    %235 = vector.shape_cast %234 : vector<1x1x1x16xf32> to vector<1x16xf32>
    %c0_152 = arith.constant 0 : index
    %c3_153 = arith.constant 3 : index
    %c0_154 = arith.constant 0 : index
    %c0_155 = arith.constant 0 : index
    %236 = vector.load %arg7[%c0_152, %c3_153, %c0_154, %c0_155] : memref<1x4x1x16xf32, #tpu.memory_space<vmem>>, vector<1x1x1x16xf32>
    %237 = vector.shape_cast %236 : vector<1x1x1x16xf32> to vector<1x16xf32>
    %cst_156 = arith.constant dense<0.000000e+00> : vector<16xf32>
    %238 = vector.multi_reduction <add>, %233, %cst_156 [0, 1] : vector<2x16x16xf32> to vector<16xf32>
    %239 = vector.shape_cast %238 : vector<16xf32> to vector<1x1x16xf32>
    %cst_157 = arith.constant 3.125000e-02 : f32
    %240 = vector.broadcast %cst_157 : f32 to vector<1x1x16xf32>
    %241 = arith.mulf %239, %240 : vector<1x1x16xf32>
    %242 = vector.broadcast %241 : vector<1x1x16xf32> to vector<2x16x16xf32>
    %243 = arith.subf %233, %242 : vector<2x16x16xf32>
    %244 = arith.mulf %243, %243 : vector<2x16x16xf32>
    %cst_158 = arith.constant dense<0.000000e+00> : vector<16xf32>
    %245 = vector.multi_reduction <add>, %244, %cst_158 [0, 1] : vector<2x16x16xf32> to vector<16xf32>
    %246 = vector.shape_cast %245 : vector<16xf32> to vector<1x1x16xf32>
    %cst_159 = arith.constant 3.125000e-02 : f32
    %247 = vector.broadcast %cst_159 : f32 to vector<1x1x16xf32>
    %248 = arith.mulf %246, %247 : vector<1x1x16xf32>
    %cst_160 = arith.constant 9.99999974E-6 : f32
    %249 = vector.broadcast %cst_160 : f32 to vector<1x1x16xf32>
    %250 = arith.addf %248, %249 : vector<1x1x16xf32>
    %251 = math.rsqrt %250 : vector<1x1x16xf32>
    %252 = vector.shape_cast %235 : vector<1x16xf32> to vector<1x1x16xf32>
    %253 = arith.mulf %251, %252 : vector<1x1x16xf32>
    %254 = vector.broadcast %253 : vector<1x1x16xf32> to vector<2x16x16xf32>
    %255 = arith.mulf %243, %254 : vector<2x16x16xf32>
    %256 = vector.shape_cast %237 : vector<1x16xf32> to vector<1x1x16xf32>
    %257 = vector.broadcast %256 : vector<1x1x16xf32> to vector<2x16x16xf32>
    %258 = arith.addf %255, %257 : vector<2x16x16xf32>
    %259 = arith.addf %258, %133 : vector<2x16x16xf32>
    %cst_161 = arith.constant 0.000000e+00 : f32
    %260 = vector.broadcast %cst_161 : f32 to vector<2x16x16xf32>
    %261 = arith.maximumf %259, %260 : vector<2x16x16xf32>
    %c0_162 = arith.constant 0 : index
    %c1_163 = arith.constant 1 : index
    %c0_164 = arith.constant 0 : index
    %c0_165 = arith.constant 0 : index
    %262 = vector.load %arg8[%c0_162, %c1_163, %c0_164, %c0_165] : memref<1x2x1x16xf32, #tpu.memory_space<vmem>>, vector<1x1x1x16xf32>
    %263 = vector.shape_cast %262 : vector<1x1x1x16xf32> to vector<1x16xf32>
    %c0_166 = arith.constant 0 : index
    %c1_167 = arith.constant 1 : index
    %c0_168 = arith.constant 0 : index
    %c0_169 = arith.constant 0 : index
    %264 = vector.load %arg9[%c0_166, %c1_167, %c0_168, %c0_169] : memref<1x2x1x16xf32, #tpu.memory_space<vmem>>, vector<1x1x1x16xf32>
    %265 = vector.shape_cast %264 : vector<1x1x1x16xf32> to vector<1x16xf32>
    %cst_170 = arith.constant dense<0.000000e+00> : vector<16xf32>
    %266 = vector.multi_reduction <add>, %261, %cst_170 [0, 1] : vector<2x16x16xf32> to vector<16xf32>
    %267 = vector.shape_cast %266 : vector<16xf32> to vector<1x1x16xf32>
    %cst_171 = arith.constant 3.125000e-02 : f32
    %268 = vector.broadcast %cst_171 : f32 to vector<1x1x16xf32>
    %269 = arith.mulf %267, %268 : vector<1x1x16xf32>
    %270 = vector.broadcast %269 : vector<1x1x16xf32> to vector<2x16x16xf32>
    %271 = arith.subf %261, %270 : vector<2x16x16xf32>
    %272 = arith.mulf %271, %271 : vector<2x16x16xf32>
    %cst_172 = arith.constant dense<0.000000e+00> : vector<16xf32>
    %273 = vector.multi_reduction <add>, %272, %cst_172 [0, 1] : vector<2x16x16xf32> to vector<16xf32>
    %274 = vector.shape_cast %273 : vector<16xf32> to vector<1x1x16xf32>
    %cst_173 = arith.constant 3.125000e-02 : f32
    %275 = vector.broadcast %cst_173 : f32 to vector<1x1x16xf32>
    %276 = arith.mulf %274, %275 : vector<1x1x16xf32>
    %cst_174 = arith.constant 9.99999974E-6 : f32
    %277 = vector.broadcast %cst_174 : f32 to vector<1x1x16xf32>
    %278 = arith.addf %276, %277 : vector<1x1x16xf32>
    %279 = math.rsqrt %278 : vector<1x1x16xf32>
    %280 = vector.shape_cast %263 : vector<1x16xf32> to vector<1x1x16xf32>
    %281 = arith.mulf %279, %280 : vector<1x1x16xf32>
    %282 = vector.broadcast %281 : vector<1x1x16xf32> to vector<2x16x16xf32>
    %283 = arith.mulf %271, %282 : vector<2x16x16xf32>
    %284 = vector.shape_cast %265 : vector<1x16xf32> to vector<1x1x16xf32>
    %285 = vector.broadcast %284 : vector<1x1x16xf32> to vector<2x16x16xf32>
    %286 = arith.addf %283, %285 : vector<2x16x16xf32>
    %cst_175 = arith.constant dense<0xFF800000> : vector<2x16xf32>
    %287 = vector.multi_reduction <maximumf>, %286, %cst_175 [1] : vector<2x16x16xf32> to vector<2x16xf32>
    %c0_176 = arith.constant 0 : index
    %c1_177 = arith.constant 1 : index
    %c0_178 = arith.constant 0 : index
    %c0_179 = arith.constant 0 : index
    %288 = vector.load %arg10[%c0_176, %c1_177, %c0_178, %c0_179] : memref<1x2x2x16xf32, #tpu.memory_space<vmem>>, vector<1x1x2x16xf32>
    %289 = vector.shape_cast %288 : vector<1x1x2x16xf32> to vector<2x16xf32>
    %290 = vector.shape_cast %287 : vector<2x16xf32> to vector<1x1x2x16xf32>
    tpu.vector_store %arg10[%c0_176, %c1_177, %c0_178, %c0_179], %290 {strides = array<i32>} : memref<1x2x2x16xf32, #tpu.memory_space<vmem>>, vector<1x1x2x16xf32>,
    return
  }
  func.func @transform_0(%arg0: i32) -> (i32, i32, i32, i32) {
    %c0_i32 = arith.constant 0 : i32
    %c0_i32_0 = arith.constant 0 : i32
    %c0_i32_1 = arith.constant 0 : i32
    %c0_i32_2 = arith.constant 0 : i32
    return %arg0, %c0_i32, %c0_i32_0, %c0_i32_1 : i32, i32, i32, i32
  }
  func.func @transform_1(%arg0: i32) -> (i32, i32, i32) {
    %c0_i32 = arith.constant 0 : i32
    %c0_i32_0 = arith.constant 0 : i32
    %c0_i32_1 = arith.constant 0 : i32
    return %arg0, %c0_i32, %c0_i32_0 : i32, i32, i32
  }
  func.func @transform_2(%arg0: i32) -> (i32, i32, i32) {
    %c0_i32 = arith.constant 0 : i32
    %c0_i32_0 = arith.constant 0 : i32
    %c0_i32_1 = arith.constant 0 : i32
    return %arg0, %c0_i32, %c0_i32_0 : i32, i32, i32
  }
  func.func @transform_3(%arg0: i32) -> (i32, i32, i32) {
    %c0_i32 = arith.constant 0 : i32
    %c0_i32_0 = arith.constant 0 : i32
    %c0_i32_1 = arith.constant 0 : i32
    return %arg0, %c0_i32, %c0_i32_0 : i32, i32, i32
  }
  func.func @transform_4(%arg0: i32) -> (i32, i32, i32, i32, i32) {
    %c0_i32 = arith.constant 0 : i32
    %c0_i32_0 = arith.constant 0 : i32
    %c0_i32_1 = arith.constant 0 : i32
    %c0_i32_2 = arith.constant 0 : i32
    %c0_i32_3 = arith.constant 0 : i32
    return %arg0, %c0_i32, %c0_i32_0, %c0_i32_1, %c0_i32_2 : i32, i32, i32, i32, i32
  }
  func.func @transform_5(%arg0: i32) -> (i32, i32, i32, i32) {
    %c0_i32 = arith.constant 0 : i32
    %c0_i32_0 = arith.constant 0 : i32
    %c0_i32_1 = arith.constant 0 : i32
    %c0_i32_2 = arith.constant 0 : i32
    return %arg0, %c0_i32, %c0_i32_0, %c0_i32_1 : i32, i32, i32, i32
  }
  func.func @transform_6(%arg0: i32) -> (i32, i32, i32, i32) {
    %c0_i32 = arith.constant 0 : i32
    %c0_i32_0 = arith.constant 0 : i32
    %c0_i32_1 = arith.constant 0 : i32
    %c0_i32_2 = arith.constant 0 : i32
    return %arg0, %c0_i32, %c0_i32_0, %c0_i32_1 : i32, i32, i32, i32
  }
  func.func @transform_7(%arg0: i32) -> (i32, i32, i32, i32) {
    %c0_i32 = arith.constant 0 : i32
    %c0_i32_0 = arith.constant 0 : i32
    %c0_i32_1 = arith.constant 0 : i32
    %c0_i32_2 = arith.constant 0 : i32
    return %arg0, %c0_i32, %c0_i32_0, %c0_i32_1 : i32, i32, i32, i32
  }
  func.func @transform_8(%arg0: i32) -> (i32, i32, i32, i32) {
    %c0_i32 = arith.constant 0 : i32
    %c0_i32_0 = arith.constant 0 : i32
    %c0_i32_1 = arith.constant 0 : i32
    %c0_i32_2 = arith.constant 0 : i32
    return %arg0, %c0_i32, %c0_i32_0, %c0_i32_1 : i32, i32, i32, i32
  }
  func.func @transform_9(%arg0: i32) -> (i32, i32, i32, i32) {
    %c0_i32 = arith.constant 0 : i32
    %c0_i32_0 = arith.constant 0 : i32
    %c0_i32_1 = arith.constant 0 : i32
    %c0_i32_2 = arith.constant 0 : i32
    return %arg0, %c0_i32, %c0_i32_0, %c0_i32_1 : i32, i32, i32, i32
  }
}

</mosaic_0001>

<llo_original>
// kernel: tpu_custom_call.1
$region0: #{tpu_custom_call.1}
  #allocation0 [shape = 'u32[]', space=smem, size = 0x4, offset = 0x4, fixed_abs, tag = 'smem constant byte address 0x4 - core index']
  #allocation1 [shape = 'u32[144,128]{1,0:T(1,128)}', space=vmem, size = 0x12000, scoped, tag = 'internal scratch']
  %s0 = inlined_call_operand.hbm [shape: bf16[2,2,16,16], index: 0, kind: input, shape index: {}]
  %s1 = inlined_call_operand.hbm [shape: bf16[2,16,16], index: 1, kind: input, shape index: {}]
  %s2 = inlined_call_operand.vmem [shape: f32[2,1,16], index: 2, kind: input, shape index: {}]
  %s3 = inlined_call_operand.hbm [shape: f32[2,1,16], index: 3, kind: input, shape index: {}]
  %s4 = inlined_call_operand.hbm [shape: bf16[2,4,3,16,16], index: 4, kind: input, shape index: {}]
  %s5 = inlined_call_operand.vmem [shape: f32[2,4,1,16], index: 5, kind: input, shape index: {}]
  %s6 = inlined_call_operand.vmem [shape: f32[2,4,1,16], index: 6, kind: input, shape index: {}]
  %s7 = inlined_call_operand.vmem [shape: f32[2,2,1,16], index: 7, kind: input, shape index: {}]
  %s8 = inlined_call_operand.vmem [shape: f32[2,2,1,16], index: 8, kind: input, shape index: {}]
  %s9 = inlined_call_operand.hbm [shape: f32[2,2,2,16], index: 9, kind: output, shape index: {}]
  %s10 = sld [smem:[#allocation0]]
  $region85: #{tpu_custom_call.1} parent=0
    _
  %s12 = ssub.s32 1, %s10
  %s13 = scalar_select 0, %s12, %s10
  $region1: #{tpu_custom_call.1} parent=0
    #allocation2 [shape = 'u8[16384]{0}', space=vmem, size = 0x4000, scoped, tag = 'input window, operand 0']
    #allocation3 [shape = 's32[2]{0}', space=sflag, size = 0x8, scoped, tag = 'scoped memory for tpu_custom_call.1']
    #allocation4 [shape = 's32[2]{0}', space=sflag, size = 0x8, scoped, tag = 'scoped memory for tpu_custom_call.1']
    #allocation5 [shape = 'u8[8192]{0}', space=vmem, size = 0x2000, scoped, tag = 'input window, operand 1']
    #allocation6 [shape = 's32[2]{0}', space=sflag, size = 0x8, scoped, tag = 'scoped memory for tpu_custom_call.1']
    #allocation7 [shape = 'u8[1024]{0}', space=vmem, size = 0x400, scoped, tag = 'input window, operand 3']
    #allocation8 [shape = 'u8[98304]{0}', space=vmem, size = 0x18000, scoped, tag = 'input window, operand 4']
    #allocation9 [shape = 's32[2]{0}', space=sflag, size = 0x8, scoped, tag = 'scoped memory for tpu_custom_call.1']
    #allocation10 [shape = 'u8[4096]{0}', space=vmem, size = 0x1000, scoped, tag = 'output window, operand 0']
    %14 = vsyncpa [#allocation3], 0
    %s15 = scalar_lea.sflag [#allocation3], 1
    %16 = vsyncpa %s15, 0
    %17 = vsyncpa [#allocation6], 0
    %s18 = scalar_lea.sflag [#allocation6], 1
    %19 = vsyncpa %s18, 0
    %20 = vsyncpa [#allocation9], 0
    %s21 = scalar_lea.sflag [#allocation9], 1
    %22 = vsyncpa %s21, 0
    %23 = vsyncpa [#allocation4], 0
    %s24 = scalar_lea.sflag [#allocation4], 1
    %25 = vsyncpa %s24, 0
    loop: start=0, step=1, limit=4
    $region2: #{tpu_custom_call.1} parent=1 // loop_pre_header
      _
    $region3: #{tpu_custom_call.1} parent=1 // loop_header
      %s27 = sphi 0, %s31
      %p28 = scmp.ge.s32.totalorder %s27, 4
      %s37 = sphi 0, %s39
      %s40 = sphi 0, %s37
      %s41 = sphi 0, %s40
      %s57 = sphi 0, %s41
      %s63 = sphi 0, %s65
      %s66 = sphi 0, %s63
      %s67 = sphi 0, %s66
      %s83 = sphi 0, %s67
      %s89 = sphi 0, %s91
      %s92 = sphi 0, %s89
      %s93 = sphi 0, %s92
      %s109 = sphi 0, %s93
      %s115 = sphi 0, %s117
      %s118 = sphi 0, %s115
      %s119 = sphi 0, %s118
      %s135 = sphi 0, %s119
      %s141 = sphi 0, %s143
      %s144 = sphi 0, %s141
      %s145 = sphi 0, %s144
      %s161 = sphi 0, %s145
      %s167 = sphi 0, %s169
      %s170 = sphi 0, %s167
      %s171 = sphi 0, %s170
      %s187 = sphi 0, %s171
      %s193 = sphi 0, %s195
      %s196 = sphi 0, %s193
      %s197 = sphi 0, %s196
      %s213 = sphi 0, %s197
      %s219 = sphi 0, %s221
      %s222 = sphi 0, %s219
      %s223 = sphi 0, %s222
      %s239 = sphi 0, %s223
      %s245 = sphi 0, %s247
      %s248 = sphi 0, %s245
      %s249 = sphi 0, %s248
      %s265 = sphi 0, %s249
      %s271 = sphi 0, %s273
      %s274 = sphi 0, %s271
      %s275 = sphi 0, %s274
      %s291 = sphi 0, %s275
    $region4: #{tpu_custom_call.1} parent=1 // loop_header_branch
      %30 = sbr.rel (%p28) target = $region8
    $region5: #{tpu_custom_call.1} parent=1 // loop_body
      %s32 = ssub.s32 %s27, 1
      %s33 = ssub.s32 %s27, 2
      %s34 = sadd.s32 %s27, 1
      %s35 = ssub.s32 %s27, %s34
      %p36 = scmp.eq.s32.totalorder %s35, 0
      %s38 = sadd.s32 %s37, 1
      %s39 = scalar_select %p36, %s37, %s38
      %p42 = pneg %p36
      %p43 = scmp.eq.s32.totalorder %s27, 1
      %p44 = por %p42, %p43
      %p45 = scmp.ne.s32.totalorder %s37, %s40
      %p46 = scmp.eq.s32.totalorder %s27, 0
      %p47 = por %p45, %p46
      %p48 = scmp.ne.s32.totalorder %s37, %s40
      %p49 = scmp.eq.s32.totalorder %s32, 1
      %p50 = por %p48, %p49
      %p51 = scmp.ne.s32.totalorder %s40, %s41
      %p52 = scmp.eq.s32.totalorder %s32, 0
      %p53 = por %p51, %p52
      %p54 = scmp.ne.s32.totalorder %s40, %s41
      %p55 = scmp.eq.s32.totalorder %s33, 1
      %p56 = por %p54, %p55
      %p58 = scmp.ne.s32.totalorder %s41, %s57
      %p59 = scmp.eq.s32.totalorder %s33, 0
      %p60 = por %p58, %p59
      %s61 = ssub.s32 %s27, %s34
      %p62 = scmp.eq.s32.totalorder %s61, 0
      %s64 = sadd.s32 %s63, 1
      %s65 = scalar_select %p62, %s63, %s64
      %p68 = pneg %p62
      %p69 = scmp.eq.s32.totalorder %s27, 1
      %p70 = por %p68, %p69
      %p71 = scmp.ne.s32.totalorder %s63, %s66
      %p72 = scmp.eq.s32.totalorder %s27, 0
      %p73 = por %p71, %p72
      %p74 = scmp.ne.s32.totalorder %s63, %s66
      %p75 = scmp.eq.s32.totalorder %s32, 1
      %p76 = por %p74, %p75
      %p77 = scmp.ne.s32.totalorder %s66, %s67
      %p78 = scmp.eq.s32.totalorder %s32, 0
      %p79 = por %p77, %p78
      %p80 = scmp.ne.s32.totalorder %s66, %s67
      %p81 = scmp.eq.s32.totalorder %s33, 1
      %p82 = por %p80, %p81
      %p84 = scmp.ne.s32.totalorder %s67, %s83
      %p85 = scmp.eq.s32.totalorder %s33, 0
      %p86 = por %p84, %p85
      %s87 = ssub.s32 %s27, %s34
      %p88 = scmp.eq.s32.totalorder %s87, 0
      %s90 = sadd.s32 %s89, 1
      %s91 = scalar_select %p88, %s89, %s90
      %p94 = pneg %p88
      %p95 = scmp.eq.s32.totalorder %s27, 1
      %p96 = por %p94, %p95
      %p97 = scmp.ne.s32.totalorder %s89, %s92
      %p98 = scmp.eq.s32.totalorder %s27, 0
      %p99 = por %p97, %p98
      %p100 = scmp.ne.s32.totalorder %s89, %s92
      %p101 = scmp.eq.s32.totalorder %s32, 1
      %p102 = por %p100, %p101
      %p103 = scmp.ne.s32.totalorder %s92, %s93
      %p104 = scmp.eq.s32.totalorder %s32, 0
      %p105 = por %p103, %p104
      %p106 = scmp.ne.s32.totalorder %s92, %s93
      %p107 = scmp.eq.s32.totalorder %s33, 1
      %p108 = por %p106, %p107
      %p110 = scmp.ne.s32.totalorder %s93, %s109
      %p111 = scmp.eq.s32.totalorder %s33, 0
      %p112 = por %p110, %p111
      %s113 = ssub.s32 %s27, %s34
      %p114 = scmp.eq.s32.totalorder %s113, 0
      %s116 = sadd.s32 %s115, 1
      %s117 = scalar_select %p114, %s115, %s116
      %p120 = pneg %p114
      %p121 = scmp.eq.s32.totalorder %s27, 1
      %p122 = por %p120, %p121
      %p123 = scmp.ne.s32.totalorder %s115, %s118
      %p124 = scmp.eq.s32.totalorder %s27, 0
      %p125 = por %p123, %p124
      %p126 = scmp.ne.s32.totalorder %s115, %s118
      %p127 = scmp.eq.s32.totalorder %s32, 1
      %p128 = por %p126, %p127
      %p129 = scmp.ne.s32.totalorder %s118, %s119
      %p130 = scmp.eq.s32.totalorder %s32, 0
      %p131 = por %p129, %p130
      %p132 = scmp.ne.s32.totalorder %s118, %s119
      %p133 = scmp.eq.s32.totalorder %s33, 1
      %p134 = por %p132, %p133
      %p136 = scmp.ne.s32.totalorder %s119, %s135
      %p137 = scmp.eq.s32.totalorder %s33, 0
      %p138 = por %p136, %p137
      %s139 = ssub.s32 %s27, %s34
      %p140 = scmp.eq.s32.totalorder %s139, 0
      %s142 = sadd.s32 %s141, 1
      %s143 = scalar_select %p140, %s141, %s142
      %p146 = pneg %p140
      %p147 = scmp.eq.s32.totalorder %s27, 1
      %p148 = por %p146, %p147
      %p149 = scmp.ne.s32.totalorder %s141, %s144
      %p150 = scmp.eq.s32.totalorder %s27, 0
      %p151 = por %p149, %p150
      %p152 = scmp.ne.s32.totalorder %s141, %s144
      %p153 = scmp.eq.s32.totalorder %s32, 1
      %p154 = por %p152, %p153
      %p155 = scmp.ne.s32.totalorder %s144, %s145
      %p156 = scmp.eq.s32.totalorder %s32, 0
      %p157 = por %p155, %p156
      %p158 = scmp.ne.s32.totalorder %s144, %s145
      %p159 = scmp.eq.s32.totalorder %s33, 1
      %p160 = por %p158, %p159
      %p162 = scmp.ne.s32.totalorder %s145, %s161
      %p163 = scmp.eq.s32.totalorder %s33, 0
      %p164 = por %p162, %p163
      %s165 = ssub.s32 %s27, %s34
      %p166 = scmp.eq.s32.totalorder %s165, 0
      %s168 = sadd.s32 %s167, 1
      %s169 = scalar_select %p166, %s167, %s168
      %p172 = pneg %p166
      %p173 = scmp.eq.s32.totalorder %s27, 1
      %p174 = por %p172, %p173
      %p175 = scmp.ne.s32.totalorder %s167, %s170
      %p176 = scmp.eq.s32.totalorder %s27, 0
      %p177 = por %p175, %p176
      %p178 = scmp.ne.s32.totalorder %s167, %s170
      %p179 = scmp.eq.s32.totalorder %s32, 1
      %p180 = por %p178, %p179
      %p181 = scmp.ne.s32.totalorder %s170, %s171
      %p182 = scmp.eq.s32.totalorder %s32, 0
      %p183 = por %p181, %p182
      %p184 = scmp.ne.s32.totalorder %s170, %s171
      %p185 = scmp.eq.s32.totalorder %s33, 1
      %p186 = por %p184, %p185
      %p188 = scmp.ne.s32.totalorder %s171, %s187
      %p189 = scmp.eq.s32.totalorder %s33, 0
      %p190 = por %p188, %p189
      %s191 = ssub.s32 %s27, %s34
      %p192 = scmp.eq.s32.totalorder %s191, 0
      %s194 = sadd.s32 %s193, 1
      %s195 = scalar_select %p192, %s193, %s194
      %p198 = pneg %p192
      %p199 = scmp.eq.s32.totalorder %s27, 1
      %p200 = por %p198, %p199
      %p201 = scmp.ne.s32.totalorder %s193, %s196
      %p202 = scmp.eq.s32.totalorder %s27, 0
      %p203 = por %p201, %p202
      %p204 = scmp.ne.s32.totalorder %s193, %s196
      %p205 = scmp.eq.s32.totalorder %s32, 1
      %p206 = por %p204, %p205
      %p207 = scmp.ne.s32.totalorder %s196, %s197
      %p208 = scmp.eq.s32.totalorder %s32, 0
      %p209 = por %p207, %p208
      %p210 = scmp.ne.s32.totalorder %s196, %s197
      %p211 = scmp.eq.s32.totalorder %s33, 1
      %p212 = por %p210, %p211
      %p214 = scmp.ne.s32.totalorder %s197, %s213
      %p215 = scmp.eq.s32.totalorder %s33, 0
      %p216 = por %p214, %p215
      %s217 = ssub.s32 %s27, %s34
      %p218 = scmp.eq.s32.totalorder %s217, 0
      %s220 = sadd.s32 %s219, 1
      %s221 = scalar_select %p218, %s219, %s220
      %p224 = pneg %p218
      %p225 = scmp.eq.s32.totalorder %s27, 1
      %p226 = por %p224, %p225
      %p227 = scmp.ne.s32.totalorder %s219, %s222
      %p228 = scmp.eq.s32.totalorder %s27, 0
      %p229 = por %p227, %p228
      %p230 = scmp.ne.s32.totalorder %s219, %s222
      %p231 = scmp.eq.s32.totalorder %s32, 1
      %p232 = por %p230, %p231
      %p233 = scmp.ne.s32.totalorder %s222, %s223
      %p234 = scmp.eq.s32.totalorder %s32, 0
      %p235 = por %p233, %p234
      %p236 = scmp.ne.s32.totalorder %s222, %s223
      %p237 = scmp.eq.s32.totalorder %s33, 1
      %p238 = por %p236, %p237
      %p240 = scmp.ne.s32.totalorder %s223, %s239
      %p241 = scmp.eq.s32.totalorder %s33, 0
      %p242 = por %p240, %p241
      %s243 = ssub.s32 %s27, %s34
      %p244 = scmp.eq.s32.totalorder %s243, 0
      %s246 = sadd.s32 %s245, 1
      %s247 = scalar_select %p244, %s245, %s246
      %p250 = pneg %p244
      %p251 = scmp.eq.s32.totalorder %s27, 1
      %p252 = por %p250, %p251
      %p253 = scmp.ne.s32.totalorder %s245, %s248
      %p254 = scmp.eq.s32.totalorder %s27, 0
      %p255 = por %p253, %p254
      %p256 = scmp.ne.s32.totalorder %s245, %s248
      %p257 = scmp.eq.s32.totalorder %s32, 1
      %p258 = por %p256, %p257
      %p259 = scmp.ne.s32.totalorder %s248, %s249
      %p260 = scmp.eq.s32.totalorder %s32, 0
      %p261 = por %p259, %p260
      %p262 = scmp.ne.s32.totalorder %s248, %s249
      %p263 = scmp.eq.s32.totalorder %s33, 1
      %p264 = por %p262, %p263
      %p266 = scmp.ne.s32.totalorder %s249, %s265
      %p267 = scmp.eq.s32.totalorder %s33, 0
      %p268 = por %p266, %p267
      %s269 = ssub.s32 %s27, %s34
      %p270 = scmp.eq.s32.totalorder %s269, 0
      %s272 = sadd.s32 %s271, 1
      %s273 = scalar_select %p270, %s271, %s272
      %p276 = pneg %p270
      %p277 = scmp.eq.s32.totalorder %s27, 1
      %p278 = por %p276, %p277
      %p279 = scmp.ne.s32.totalorder %s271, %s274
      %p280 = scmp.eq.s32.totalorder %s27, 0
      %p281 = por %p279, %p280
      %p282 = scmp.ne.s32.totalorder %s271, %s274
      %p283 = scmp.eq.s32.totalorder %s32, 1
      %p284 = por %p282, %p283
      %p285 = scmp.ne.s32.totalorder %s274, %s275
      %p286 = scmp.eq.s32.totalorder %s32, 0
      %p287 = por %p285, %p286
      %p288 = scmp.ne.s32.totalorder %s274, %s275
      %p289 = scmp.eq.s32.totalorder %s33, 1
      %p290 = por %p288, %p289
      %p292 = scmp.ne.s32.totalorder %s275, %s291
      %p293 = scmp.eq.s32.totalorder %s33, 0
      %p294 = por %p292, %p293
      %p295 = scmp.le.s32.totalorder 1, %s27
      %p296 = scmp.lt.s32.totalorder %s27, 3
      %p297 = pnand %p295, %p296
      %p298 = pneg %p297
      // Predicated region
      $region9: #{tpu_custom_call.1} parent=5 // pred_check
        _
      $region10: #{tpu_custom_call.1} parent=5 // pred_check_branch
        %300 = sbr.rel (%p297) target = $region12
      $region11: #{tpu_custom_call.1} parent=5 // pred_region
        %s301 = ssub.s32 %s27, 1
      $region12: #{tpu_custom_call.1} parent=5 // pred_fallthru
        _
      %p302 = scmp.lt.s32.totalorder %s27, 2
      // Predicated region
      $region13: #{tpu_custom_call.1} parent=5 // pred_check
        %p303 = pneg %p302
      $region14: #{tpu_custom_call.1} parent=5 // pred_check_branch
        %305 = sbr.rel (%p303) target = $region16
      $region15: #{tpu_custom_call.1} parent=5 // pred_region
        // Predicated region
        $region17: #{tpu_custom_call.1} parent=15 // pred_check
          %p306 = pneg %p47
        $region18: #{tpu_custom_call.1} parent=15 // pred_check_branch
          %308 = sbr.rel (%p306) target = $region20
        $region19: #{tpu_custom_call.1} parent=15 // pred_region
          %s309 = sand.u32 %s37, 1
          %s310 = scalar_lea.sflag [#allocation3], %s309
          %s311 = sand.u32 %s37, 1
          %s312 = smul.addr %s311, 16
          %s313 = scalar_lea.vmem [#allocation2], %s312
          %s315 = ssub.s32 256, 256
          %316 = vsyncadd %s310, %s315
          %s317 = smul.addr %s27, 4
          %s318 = smul.addr %s317, 64
          %s319 = scalar_lea.hbm %s0, %s318
          %s320 = sshll.u32 %s313, 4
          %s321 = int_to_ptr.vmem [resolvable:$true] %s320
          %326 = dma.hbm_to_vmem [thread:$0]  %s319, 256, %s321, %s310, 64, 64, 4
        $region20: #{tpu_custom_call.1} parent=15 // pred_fallthru
          _
        // Predicated region
        $region21: #{tpu_custom_call.1} parent=15 // pred_check
          %p327 = pneg %p73
        $region22: #{tpu_custom_call.1} parent=15 // pred_check_branch
          %329 = sbr.rel (%p327) target = $region24
        $region23: #{tpu_custom_call.1} parent=15 // pred_region
          %s330 = sand.u32 %s27, 1
          %s331 = scalar_lea.sflag [#allocation6], %s330
          %s332 = sand.u32 %s63, 1
          %s333 = smul.addr %s332, 8
          %s334 = scalar_lea.vmem [#allocation5], %s333
          %s336 = ssub.s32 128, 128
          %337 = vsyncadd %s331, %s336
          %s338 = smul.addr %s27, 2
          %s339 = smul.addr %s338, 64
          %s340 = scalar_lea.hbm %s1, %s339
          %s341 = sshll.u32 %s334, 4
          %s342 = int_to_ptr.vmem [resolvable:$true] %s341
          %347 = dma.hbm_to_vmem [thread:$0]  %s340, 128, %s342, %s331, 64, 64, 4
        $region24: #{tpu_custom_call.1} parent=15 // pred_fallthru
          _
        // Predicated region
        $region25: #{tpu_custom_call.1} parent=15 // pred_check
          %p348 = pneg %p99
        $region26: #{tpu_custom_call.1} parent=15 // pred_check_branch
          %350 = sbr.rel (%p348) target = $region28
        $region27: #{tpu_custom_call.1} parent=15 // pred_region
          %p351 = scmp.lt.s32.totalorder %s27, 1
          %s352 = scalar_select %p351, %s27, 1
          %s353 = scalar_lea.vmem %s2, %s352
        $region28: #{tpu_custom_call.1} parent=15 // pred_fallthru
          _
        // Predicated region
        $region29: #{tpu_custom_call.1} parent=15 // pred_check
          %p354 = pneg %p125
        $region30: #{tpu_custom_call.1} parent=15 // pred_check_branch
          %356 = sbr.rel (%p354) target = $region32
        $region31: #{tpu_custom_call.1} parent=15 // pred_region
          %s357 = sand.u32 %s27, 1
          %s358 = scalar_lea.sflag [#allocation6], %s357
          %s359 = sand.u32 %s115, 1
          %s360 = scalar_lea.vmem [#allocation7], %s359
          %s362 = ssub.s32 16, 16
          %363 = vsyncadd %s358, %s362
          %s364 = smul.addr %s27, 16
          %s365 = scalar_lea.hbm %s3, %s364
          %s367 = sshll.u32 %s360, 4
          %s368 = int_to_ptr.vmem [resolvable:$true] %s367
          %370 = dma.hbm_to_vmem [thread:$0]  %s365, 16, %s368, %s358
        $region32: #{tpu_custom_call.1} parent=15 // pred_fallthru
          _
        // Predicated region
        $region33: #{tpu_custom_call.1} parent=15 // pred_check
          %p371 = pneg %p151
        $region34: #{tpu_custom_call.1} parent=15 // pred_check_branch
          %373 = sbr.rel (%p371) target = $region36
        $region35: #{tpu_custom_call.1} parent=15 // pred_region
          %s374 = sand.u32 %s141, 1
          %s375 = scalar_lea.sflag [#allocation9], %s374
          %s376 = sand.u32 %s141, 1
          %s377 = smul.addr %s376, 96
          %s378 = scalar_lea.vmem [#allocation8], %s377
          %s380 = ssub.s32 1536, 1536
          %381 = vsyncadd %s375, %s380
          %s382 = smul.addr %s27, 24
          %s383 = smul.addr %s382, 64
          %s384 = scalar_lea.hbm %s4, %s383
          %s385 = sshll.u32 %s378, 4
          %s386 = int_to_ptr.vmem [resolvable:$true] %s385
          %391 = dma.hbm_to_vmem [thread:$0]  %s384, 1536, %s386, %s375, 64, 64, 4
        $region36: #{tpu_custom_call.1} parent=15 // pred_fallthru
          _
        // Predicated region
        $region37: #{tpu_custom_call.1} parent=15 // pred_check
          %p392 = pneg %p177
        $region38: #{tpu_custom_call.1} parent=15 // pred_check_branch
          %394 = sbr.rel (%p392) target = $region40
        $region39: #{tpu_custom_call.1} parent=15 // pred_region
          %p395 = scmp.lt.s32.totalorder %s27, 1
          %s396 = scalar_select %p395, %s27, 1
          %s397 = smul.addr %s396, 4
          %s398 = scalar_lea.vmem %s5, %s397
        $region40: #{tpu_custom_call.1} parent=15 // pred_fallthru
          _
        // Predicated region
        $region41: #{tpu_custom_call.1} parent=15 // pred_check
          %p399 = pneg %p203
        $region42: #{tpu_custom_call.1} parent=15 // pred_check_branch
          %401 = sbr.rel (%p399) target = $region44
        $region43: #{tpu_custom_call.1} parent=15 // pred_region
          %p402 = scmp.lt.s32.totalorder %s27, 1
          %s403 = scalar_select %p402, %s27, 1
          %s404 = smul.addr %s403, 4
          %s405 = scalar_lea.vmem %s6, %s404
        $region44: #{tpu_custom_call.1} parent=15 // pred_fallthru
          _
        // Predicated region
        $region45: #{tpu_custom_call.1} parent=15 // pred_check
          %p406 = pneg %p229
        $region46: #{tpu_custom_call.1} parent=15 // pred_check_branch
          %408 = sbr.rel (%p406) target = $region48
        $region47: #{tpu_custom_call.1} parent=15 // pred_region
          %p409 = scmp.lt.s32.totalorder %s27, 1
          %s410 = scalar_select %p409, %s27, 1
          %s411 = smul.addr %s410, 2
          %s412 = scalar_lea.vmem %s7, %s411
        $region48: #{tpu_custom_call.1} parent=15 // pred_fallthru
          _
        // Predicated region
        $region49: #{tpu_custom_call.1} parent=15 // pred_check
          %p413 = pneg %p255
        $region50: #{tpu_custom_call.1} parent=15 // pred_check_branch
          %415 = sbr.rel (%p413) target = $region52
        $region51: #{tpu_custom_call.1} parent=15 // pred_region
          %p416 = scmp.lt.s32.totalorder %s27, 1
          %s417 = scalar_select %p416, %s27, 1
          %s418 = smul.addr %s417, 2
          %s419 = scalar_lea.vmem %s8, %s418
        $region52: #{tpu_custom_call.1} parent=15 // pred_fallthru
          _
      $region16: #{tpu_custom_call.1} parent=5 // pred_fallthru
        _
      %p420 = scmp.le.s32.totalorder 1, %s27
      %p421 = scmp.lt.s32.totalorder %s27, 3
      %p422 = pnand %p420, %p421
      %p423 = pneg %p422
      // Predicated region
      $region53: #{tpu_custom_call.1} parent=5 // pred_check
        _
      $region54: #{tpu_custom_call.1} parent=5 // pred_check_branch
        %425 = sbr.rel (%p422) target = $region56
      $region55: #{tpu_custom_call.1} parent=5 // pred_region
        %s426 = ssub.s32 %s27, 1
        %s427 = sand.u32 %s40, 1
        %s428 = scalar_lea.sflag [#allocation3], %s427
        %s429 = sand.u32 %s40, 1
        %s430 = smul.addr %s429, 16
        %s431 = scalar_lea.vmem [#allocation2], %s430
        // Predicated region
        $region57: #{tpu_custom_call.1} parent=55 // pred_check
          %p432 = pneg %p53
        $region58: #{tpu_custom_call.1} parent=55 // pred_check_branch
          %434 = sbr.rel (%p432) target = $region60
        $region59: #{tpu_custom_call.1} parent=55 // pred_region
          %435 = dma.done %s428, 256
        $region60: #{tpu_custom_call.1} parent=55 // pred_fallthru
          _
        %s436 = sand.u32 %s32, 1
        %s437 = scalar_lea.sflag [#allocation6], %s436
        %s438 = sand.u32 %s66, 1
        %s439 = smul.addr %s438, 8
        %s440 = scalar_lea.vmem [#allocation5], %s439
        // Predicated region
        $region61: #{tpu_custom_call.1} parent=55 // pred_check
          %p441 = pneg %p79
        $region62: #{tpu_custom_call.1} parent=55 // pred_check_branch
          %443 = sbr.rel (%p441) target = $region64
        $region63: #{tpu_custom_call.1} parent=55 // pred_region
          %444 = dma.done %s437, 128
        $region64: #{tpu_custom_call.1} parent=55 // pred_fallthru
          _
        %s445 = sand.u32 %s32, 1
        %s446 = scalar_lea.sflag [#allocation6], %s445
        %s447 = sand.u32 %s118, 1
        %s448 = scalar_lea.vmem [#allocation7], %s447
        // Predicated region
        $region65: #{tpu_custom_call.1} parent=55 // pred_check
          %p449 = pneg %p131
        $region66: #{tpu_custom_call.1} parent=55 // pred_check_branch
          %451 = sbr.rel (%p449) target = $region68
        $region67: #{tpu_custom_call.1} parent=55 // pred_region
          %452 = dma.done %s446, 16
        $region68: #{tpu_custom_call.1} parent=55 // pred_fallthru
          _
        %s453 = sand.u32 %s144, 1
        %s454 = scalar_lea.sflag [#allocation9], %s453
        %s455 = sand.u32 %s144, 1
        %s456 = smul.addr %s455, 96
        %s457 = scalar_lea.vmem [#allocation8], %s456
        // Predicated region
        $region69: #{tpu_custom_call.1} parent=55 // pred_check
          %p458 = pneg %p157
        $region70: #{tpu_custom_call.1} parent=55 // pred_check_branch
          %460 = sbr.rel (%p458) target = $region72
        $region71: #{tpu_custom_call.1} parent=55 // pred_region
          %461 = dma.done %s454, 1536
        $region72: #{tpu_custom_call.1} parent=55 // pred_fallthru
          _
        %s462 = sand.u32 %s40, 1
        %s463 = scalar_lea.sflag [#allocation3], %s462
        %s464 = sand.u32 %s40, 1
        %s465 = smul.addr %s464, 16
        %s466 = scalar_lea.vmem [#allocation2], %s465
        %p467 = pneg %p53
        %p468 = pneg %p50
        %s469 = sand.u32 %s32, 1
        %s470 = scalar_lea.sflag [#allocation6], %s469
        %s471 = sand.u32 %s66, 1
        %s472 = smul.addr %s471, 8
        %s473 = scalar_lea.vmem [#allocation5], %s472
        %p474 = pneg %p79
        %p475 = pneg %p76
        %p476 = scmp.lt.s32.totalorder %s32, 1
        %s477 = scalar_select %p476, %s32, 1
        %s478 = scalar_lea.vmem %s2, %s477
        %p479 = pneg %p105
        %p480 = pneg %p102
        %s481 = sand.u32 %s32, 1
        %s482 = scalar_lea.sflag [#allocation6], %s481
        %s483 = sand.u32 %s118, 1
        %s484 = scalar_lea.vmem [#allocation7], %s483
        %p485 = pneg %p131
        %p486 = pneg %p128
        %s487 = sand.u32 %s144, 1
        %s488 = scalar_lea.sflag [#allocation9], %s487
        %s489 = sand.u32 %s144, 1
        %s490 = smul.addr %s489, 96
        %s491 = scalar_lea.vmem [#allocation8], %s490
        %p492 = pneg %p157
        %p493 = pneg %p154
        %p494 = scmp.lt.s32.totalorder %s32, 1
        %s495 = scalar_select %p494, %s32, 1
        %s496 = smul.addr %s495, 4
        %s497 = scalar_lea.vmem %s5, %s496
        %p498 = pneg %p183
        %p499 = pneg %p180
        %p500 = scmp.lt.s32.totalorder %s32, 1
        %s501 = scalar_select %p500, %s32, 1
        %s502 = smul.addr %s501, 4
        %s503 = scalar_lea.vmem %s6, %s502
        %p504 = pneg %p209
        %p505 = pneg %p206
        %p506 = scmp.lt.s32.totalorder %s32, 1
        %s507 = scalar_select %p506, %s32, 1
        %s508 = smul.addr %s507, 2
        %s509 = scalar_lea.vmem %s7, %s508
        %p510 = pneg %p235
        %p511 = pneg %p232
        %p512 = scmp.lt.s32.totalorder %s32, 1
        %s513 = scalar_select %p512, %s32, 1
        %s514 = smul.addr %s513, 2
        %s515 = scalar_lea.vmem %s8, %s514
        %p516 = pneg %p261
        %p517 = pneg %p258
        %p518 = pneg %p287
        %p519 = pneg %p284
        %s520 = sand.u32 %s274, 1
        %s521 = scalar_lea.sflag [#allocation4], %s520
        %s522 = sand.u32 %s274, 1
        %s523 = smul.addr %s522, 4
        %s524 = scalar_lea.vmem [#allocation10], %s523
        %p525 = scmp.lt.s32.totalorder %s32, 1
        %s526 = scalar_select %p525, %s32, 1
        %s527 = scalar_lea.vmem %s2, %s526
        %p528 = scmp.lt.s32.totalorder %s32, 1
        %s529 = scalar_select %p528, %s32, 1
        %s530 = smul.addr %s529, 4
        %s531 = scalar_lea.vmem %s5, %s530
        %p532 = scmp.lt.s32.totalorder %s32, 1
        %s533 = scalar_select %p532, %s32, 1
        %s534 = smul.addr %s533, 4
        %s535 = scalar_lea.vmem %s6, %s534
        %p536 = scmp.lt.s32.totalorder %s32, 1
        %s537 = scalar_select %p536, %s32, 1
        %s538 = smul.addr %s537, 2
        %s539 = scalar_lea.vmem %s7, %s538
        %p540 = scmp.lt.s32.totalorder %s32, 1
        %s541 = scalar_select %p540, %s32, 1
        %s542 = smul.addr %s541, 2
        %s543 = scalar_lea.vmem %s8, %s542
        %v545 = vld [vmem:[%s431] sm:$0xf]
        %v546 = vld [vmem:[%s431 + $0x4] sm:$0xf]
        %v547 = vld [vmem:[%s431 + $0x8] sm:$0xf]
        %v548 = vld [vmem:[%s431 + $0xc] sm:$0xf]
        %v549 = vld [vmem:[%s440] sm:$0xf]
        %v550 = vld [vmem:[%s440 + $0x4] sm:$0xf]
        %v555 = vunpack.c.l.b16 %v545
        %v556 = vunpack.c.l.b16 %v546
        %v557 = vunpack.c.l.b16 %v547
        %v558 = vunpack.c.l.b16 %v548
        %v559 = vpack.c.b16 %v556, %v555
        %v560 = vpack.c.b16 %v558, %v557
        %v563 = vunpack.c.l.b16 %v549
        %v564 = vunpack.c.l.b16 %v550
        %v565 = vpack.c.b16 %v564, %v563
        %vm567 = vcmask 130048
        %v569 = vsel %vm567, %v559, 0
        %v572 = vsel %vm567, %v560, 0
        %574 = vmatprep.subr.bf16.mxu0 0
        %575 = vmatpush1.bf16.msra.mxu0 %v565
        %576 = vmatprep.subr.bf16.mxu0 0
        %577 = vmatpush1.bf16.msra.mxu0 0
        %578 = vmatprep.subr.bf16.mxu0 0
        %579 = vmatpush1.bf16.msra.mxu0 0
        %580 = vmatprep.subr.bf16.mxu0 0
        %581 = vmatpush1.bf16.msra.mxu0 0
        %582 = vmatprep.subr.bf16.mxu0 0
        %583 = vmatpush1.bf16.msra.mxu0 0
        %584 = vmatprep.subr.bf16.mxu0 0
        %585 = vmatpush1.bf16.msra.mxu0 0
        %586 = vmatprep.subr.bf16.mxu0 0
        %587 = vmatpush1.bf16.msra.mxu0 0
        %588 = vmatprep.subr.bf16.mxu0 0
        %589 = vmatpush1.bf16.msra.mxu0 0
        %590 = vmatprep.subr.bf16.mxu0 0
        %591 = vmatpush1.bf16.msra.mxu0 0
        %592 = vmatprep.subr.bf16.mxu0 0
        %593 = vmatpush1.bf16.msra.mxu0 0
        %594 = vmatprep.subr.bf16.mxu0 0
        %595 = vmatpush1.bf16.msra.mxu0 0
        %596 = vmatprep.subr.bf16.mxu0 0
        %597 = vmatpush1.bf16.msra.mxu0 0
        %598 = vmatprep.subr.bf16.mxu0 0
        %599 = vmatpush1.bf16.msra.mxu0 0
        %600 = vmatprep.subr.bf16.mxu0 0
        %601 = vmatpush1.bf16.msra.mxu0 0
        %602 = vmatprep.subr.bf16.mxu0 0
        %603 = vmatpush1.bf16.msra.mxu0 0
        %604 = vmatprep.subr.bf16.mxu0 0
        %605 = vmatpush1.bf16.msra.mxu0 0
        %606 = vmatprep.mubr.bf16.mxu0 0
        %607 = vmatmul.mubr.bf16.gmra.mrb[0].mxu0 %v569
        %v608 = vpop.f32.mrb[0].mxu0
        %v609 = vadd.f32 0.0, %v608
        %v610 = vpop.f32.mrb[0].mxu0
        %v611 = vpop.f32.mrb[0].mxu0
        %v612 = vadd.f32 0.0, %v611
        %v613 = vpop.f32.mrb[0].mxu0
        %614 = vmatprep.mubr.bf16.mxu0 0
        %615 = vmatmul.mubr.bf16.gmra.mrb[0].mxu0 %v572
        %v616 = vpop.f32.mrb[0].mxu0
        %v617 = vadd.f32 0.0, %v616
        %v618 = vpop.f32.mrb[0].mxu0
        %v619 = vpop.f32.mrb[0].mxu0
        %v620 = vadd.f32 0.0, %v619
        %v621 = vpop.f32.mrb[0].mxu0
        %622 = vdwg.mxu0
        %v623 = vld [vmem:[%s527] sm:$0x1]
        %v624 = vld [vmem:[%s448] sm:$0x1]
        %v625 = vsel %vm567, %v609, 0.0
        %v626 = vsel %vm567, %v612, 0.0
        %v627 = vadd.f32 %v625, %v626
        %v628 = vsel %vm567, %v617, 0.0
        %v629 = vadd.f32 %v627, %v628
        %v630 = vsel %vm567, %v620, 0.0
        %v631 = vadd.f32 %v629, %v630
        %v632 = vrot.slane %v631, 4
        %v633 = vadd.f32 %v631, %v632
        %v634 = vrot.slane %v633, 2
        %v635 = vadd.f32 %v633, %v634
        %v636 = vrot.slane %v635, 1
        %v637 = vadd.f32 %v635, %v636
        %v638 = vmul.f32 %v637, 0.03125
        %v639 = vsub.f32 %v609, %v638
        %v640 = vsub.f32 %v612, %v638
        %v641 = vsub.f32 %v617, %v638
        %v642 = vsub.f32 %v620, %v638
        %v643 = vmul.f32 %v639, %v639
        %v644 = vmul.f32 %v640, %v640
        %v645 = vmul.f32 %v641, %v641
        %v646 = vmul.f32 %v642, %v642
        %v647 = vsel %vm567, %v643, 0.0
        %v648 = vsel %vm567, %v644, 0.0
        %v649 = vadd.f32 %v647, %v648
        %v650 = vsel %vm567, %v645, 0.0
        %v651 = vadd.f32 %v649, %v650
        %v652 = vsel %vm567, %v646, 0.0
        %v653 = vadd.f32 %v651, %v652
        %v654 = vrot.slane %v653, 4
        %v655 = vadd.f32 %v653, %v654
        %v656 = vrot.slane %v655, 2
        %v657 = vadd.f32 %v655, %v656
        %v658 = vrot.slane %v657, 1
        %v659 = vadd.f32 %v657, %v658
        %v660 = vmul.f32 %v659, 0.03125
        %v661 = vadd.f32 %v660, 1e-05
        %v662 = vrsqrt.pop %v661
        %v663 = vmul.f32 %v662, %v623
        %v664 = vlaneseq
        %v665 = vshrl.u32 %v664, 7
        %v666 = vsub.s32 0, %v665
        %v667 = vrot.slane %v663, %v666
        %v668 = vmul.f32 %v639, %v667
        %v669 = vmul.f32 %v640, %v667
        %v670 = vmul.f32 %v641, %v667
        %v671 = vmul.f32 %v642, %v667
        %v673 = vlaneseq
        %v674 = vshrl.u32 %v673, 7
        %v675 = vsub.s32 0, %v674
        %v676 = vrot.slane %v624, %v675
        %v678 = vadd.f32 %v668, %v676
        %v679 = vadd.f32 %v669, %v676
        %v680 = vadd.f32 %v670, %v676
        %v681 = vadd.f32 %v671, %v676
        %v682 = vmax.f32 %v678, 0.0
        %v683 = vmax.f32 %v679, 0.0
        %v684 = vmax.f32 %v680, 0.0
        %v685 = vmax.f32 %v681, 0.0
        %v686 = vpack.c.bf16 %v683, %v682
        %v687 = vpack.c.bf16 %v685, %v684
        %v689 = vshrl.u32 %v686, 16
        %v691 = vrot.slane %v689, 7
        %v692 = vshll.u32 %v686, 16
        %v694 = vor.u32 %v691, %v692
        %v696 = vshrl.u32 %v687, 16
        %v698 = vrot.slane %v696, 7
        %v699 = vshll.u32 %v687, 16
        %v701 = vor.u32 %v698, %v699
        %vm704 = vcmask 1040384
        %vm705 = vsmask.f32 256
        %vm706 = vmand %vm704, %vm705
        %v707 = vsel %vm706, 0, %v694
        %v708 = vsel %vm706, 0, %v701
        %v709 = vrot.slane %v692, 1
        %v710 = vor.u32 %v689, %v709
        %v711 = vrot.slane %v699, 1
        %v712 = vor.u32 %v696, %v711
        %vm715 = vcmask 1047552
        %vm716 = vsmask.f32 7424
        %vm717 = vmand %vm715, %vm716
        %v718 = vsel %vm717, %v710, 0
        %v719 = vsel %vm717, %v712, 0
        %v720 = vld [vmem:[%s457] sm:$0xf]
        %v721 = vld [vmem:[%s457 + $0x4] sm:$0xf]
        %v724 = vunpack.c.l.b16 %v720
        %v725 = vunpack.c.l.b16 %v721
        %v726 = vpack.c.b16 %v725, %v724
        %v729 = vsel %vm567, %v707, 0
        %v732 = vsel %vm567, %v708, 0
        %734 = vmatprep.subr.bf16.mxu0 0
        %735 = vmatpush1.bf16.msra.mxu0 %v726
        %736 = vmatprep.subr.bf16.mxu0 0
        %737 = vmatpush1.bf16.msra.mxu0 0
        %738 = vmatprep.subr.bf16.mxu0 0
        %739 = vmatpush1.bf16.msra.mxu0 0
        %740 = vmatprep.subr.bf16.mxu0 0
        %741 = vmatpush1.bf16.msra.mxu0 0
        %742 = vmatprep.subr.bf16.mxu0 0
        %743 = vmatpush1.bf16.msra.mxu0 0
        %744 = vmatprep.subr.bf16.mxu0 0
        %745 = vmatpush1.bf16.msra.mxu0 0
        %746 = vmatprep.subr.bf16.mxu0 0
        %747 = vmatpush1.bf16.msra.mxu0 0
        %748 = vmatprep.subr.bf16.mxu0 0
        %749 = vmatpush1.bf16.msra.mxu0 0
        %750 = vmatprep.subr.bf16.mxu0 0
        %751 = vmatpush1.bf16.msra.mxu0 0
        %752 = vmatprep.subr.bf16.mxu0 0
        %753 = vmatpush1.bf16.msra.mxu0 0
        %754 = vmatprep.subr.bf16.mxu0 0
        %755 = vmatpush1.bf16.msra.mxu0 0
        %756 = vmatprep.subr.bf16.mxu0 0
        %757 = vmatpush1.bf16.msra.mxu0 0
        %758 = vmatprep.subr.bf16.mxu0 0
        %759 = vmatpush1.bf16.msra.mxu0 0
        %760 = vmatprep.subr.bf16.mxu0 0
        %761 = vmatpush1.bf16.msra.mxu0 0
        %762 = vmatprep.subr.bf16.mxu0 0
        %763 = vmatpush1.bf16.msra.mxu0 0
        %764 = vmatprep.subr.bf16.mxu0 0
        %765 = vmatpush1.bf16.msra.mxu0 0
        %766 = vmatprep.mubr.bf16.mxu0 0
        %767 = vmatmul.mubr.bf16.gmra.mrb[0].mxu0 %v729
        %v768 = vpop.f32.mrb[0].mxu0
        %v769 = vadd.f32 0.0, %v768
        %v770 = vpop.f32.mrb[0].mxu0
        %v771 = vpop.f32.mrb[0].mxu0
        %v772 = vadd.f32 0.0, %v771
        %v773 = vpop.f32.mrb[0].mxu0
        %774 = vmatprep.mubr.bf16.mxu0 0
        %775 = vmatmul.mubr.bf16.gmra.mrb[0].mxu0 %v732
        %v776 = vpop.f32.mrb[0].mxu0
        %v777 = vadd.f32 0.0, %v776
        %v778 = vpop.f32.mrb[0].mxu0
        %v779 = vpop.f32.mrb[0].mxu0
        %v780 = vadd.f32 0.0, %v779
        %v781 = vpop.f32.mrb[0].mxu0
        %782 = vdwg.mxu0
        %s783 = scalar_lea.vmem %s457, 8 [#allocation8]
        %v784 = vld [vmem:[%s783] sm:$0xf]
        %v785 = vld [vmem:[%s783 + $0x4] sm:$0xf]
        %v788 = vunpack.c.l.b16 %v784
        %v789 = vunpack.c.l.b16 %v785
        %v790 = vpack.c.b16 %v789, %v788
        %v792 = vsel %vm567, %v686, 0
        %v794 = vsel %vm567, %v687, 0
        %796 = vmatprep.subr.bf16.mxu0 0
        %797 = vmatpush1.bf16.msra.mxu0 %v790
        %798 = vmatprep.subr.bf16.mxu0 0
        %799 = vmatpush1.bf16.msra.mxu0 0
        %800 = vmatprep.subr.bf16.mxu0 0
        %801 = vmatpush1.bf16.msra.mxu0 0
        %802 = vmatprep.subr.bf16.mxu0 0
        %803 = vmatpush1.bf16.msra.mxu0 0
        %804 = vmatprep.subr.bf16.mxu0 0
        %805 = vmatpush1.bf16.msra.mxu0 0
        %806 = vmatprep.subr.bf16.mxu0 0
        %807 = vmatpush1.bf16.msra.mxu0 0
        %808 = vmatprep.subr.bf16.mxu0 0
        %809 = vmatpush1.bf16.msra.mxu0 0
        %810 = vmatprep.subr.bf16.mxu0 0
        %811 = vmatpush1.bf16.msra.mxu0 0
        %812 = vmatprep.subr.bf16.mxu0 0
        %813 = vmatpush1.bf16.msra.mxu0 0
        %814 = vmatprep.subr.bf16.mxu0 0
        %815 = vmatpush1.bf16.msra.mxu0 0
        %816 = vmatprep.subr.bf16.mxu0 0
        %817 = vmatpush1.bf16.msra.mxu0 0
        %818 = vmatprep.subr.bf16.mxu0 0
        %819 = vmatpush1.bf16.msra.mxu0 0
        %820 = vmatprep.subr.bf16.mxu0 0
        %821 = vmatpush1.bf16.msra.mxu0 0
        %822 = vmatprep.subr.bf16.mxu0 0
        %823 = vmatpush1.bf16.msra.mxu0 0
        %824 = vmatprep.subr.bf16.mxu0 0
        %825 = vmatpush1.bf16.msra.mxu0 0
        %826 = vmatprep.subr.bf16.mxu0 0
        %827 = vmatpush1.bf16.msra.mxu0 0
        %828 = vmatprep.mubr.bf16.mxu0 0
        %829 = vmatmul.mubr.bf16.gmra.mrb[0].mxu0 %v792
        %v830 = vpop.f32.mrb[0].mxu0
        %v831 = vadd.f32 0.0, %v830
        %v832 = vpop.f32.mrb[0].mxu0
        %v833 = vpop.f32.mrb[0].mxu0
        %v834 = vadd.f32 0.0, %v833
        %v835 = vpop.f32.mrb[0].mxu0
        %836 = vmatprep.mubr.bf16.mxu0 0
        %837 = vmatmul.mubr.bf16.gmra.mrb[0].mxu0 %v794
        %v838 = vpop.f32.mrb[0].mxu0
        %v839 = vadd.f32 0.0, %v838
        %v840 = vpop.f32.mrb[0].mxu0
        %v841 = vpop.f32.mrb[0].mxu0
        %v842 = vadd.f32 0.0, %v841
        %v843 = vpop.f32.mrb[0].mxu0
        %844 = vdwg.mxu0
        %v845 = vadd.f32 %v769, %v831
        %v846 = vadd.f32 %v772, %v834
        %v847 = vadd.f32 %v777, %v839
        %v848 = vadd.f32 %v780, %v842
        %s849 = scalar_lea.vmem %s457, 16 [#allocation8]
        %v850 = vld [vmem:[%s849] sm:$0xf]
        %v851 = vld [vmem:[%s849 + $0x4] sm:$0xf]
        %v854 = vunpack.c.l.b16 %v850
        %v855 = vunpack.c.l.b16 %v851
        %v856 = vpack.c.b16 %v855, %v854
        %v859 = vsel %vm567, %v718, 0
        %v862 = vsel %vm567, %v719, 0
        %864 = vmatprep.subr.bf16.mxu0 0
        %865 = vmatpush1.bf16.msra.mxu0 %v856
        %866 = vmatprep.subr.bf16.mxu0 0
        %867 = vmatpush1.bf16.msra.mxu0 0
        %868 = vmatprep.subr.bf16.mxu0 0
        %869 = vmatpush1.bf16.msra.mxu0 0
        %870 = vmatprep.subr.bf16.mxu0 0
        %871 = vmatpush1.bf16.msra.mxu0 0
        %872 = vmatprep.subr.bf16.mxu0 0
        %873 = vmatpush1.bf16.msra.mxu0 0
        %874 = vmatprep.subr.bf16.mxu0 0
        %875 = vmatpush1.bf16.msra.mxu0 0
        %876 = vmatprep.subr.bf16.mxu0 0
        %877 = vmatpush1.bf16.msra.mxu0 0
        %878 = vmatprep.subr.bf16.mxu0 0
        %879 = vmatpush1.bf16.msra.mxu0 0
        %880 = vmatprep.subr.bf16.mxu0 0
        %881 = vmatpush1.bf16.msra.mxu0 0
        %882 = vmatprep.subr.bf16.mxu0 0
        %883 = vmatpush1.bf16.msra.mxu0 0
        %884 = vmatprep.subr.bf16.mxu0 0
        %885 = vmatpush1.bf16.msra.mxu0 0
        %886 = vmatprep.subr.bf16.mxu0 0
        %887 = vmatpush1.bf16.msra.mxu0 0
        %888 = vmatprep.subr.bf16.mxu0 0
        %889 = vmatpush1.bf16.msra.mxu0 0
        %890 = vmatprep.subr.bf16.mxu0 0
        %891 = vmatpush1.bf16.msra.mxu0 0
        %892 = vmatprep.subr.bf16.mxu0 0
        %893 = vmatpush1.bf16.msra.mxu0 0
        %894 = vmatprep.subr.bf16.mxu0 0
        %895 = vmatpush1.bf16.msra.mxu0 0
        %896 = vmatprep.mubr.bf16.mxu0 0
        %897 = vmatmul.mubr.bf16.gmra.mrb[0].mxu0 %v859
        %v898 = vpop.f32.mrb[0].mxu0
        %v899 = vadd.f32 0.0, %v898
        %v900 = vpop.f32.mrb[0].mxu0
        %v901 = vpop.f32.mrb[0].mxu0
        %v902 = vadd.f32 0.0, %v901
        %v903 = vpop.f32.mrb[0].mxu0
        %904 = vmatprep.mubr.bf16.mxu0 0
        %905 = vmatmul.mubr.bf16.gmra.mrb[0].mxu0 %v862
        %v906 = vpop.f32.mrb[0].mxu0
        %v907 = vadd.f32 0.0, %v906
        %v908 = vpop.f32.mrb[0].mxu0
        %v909 = vpop.f32.mrb[0].mxu0
        %v910 = vadd.f32 0.0, %v909
        %v911 = vpop.f32.mrb[0].mxu0
        %912 = vdwg.mxu0
        %v913 = vadd.f32 %v845, %v899
        %v914 = vadd.f32 %v846, %v902
        %v915 = vadd.f32 %v847, %v907
        %v916 = vadd.f32 %v848, %v910
        %v917 = vld [vmem:[%s531] sm:$0x1]
        %v918 = vld [vmem:[%s535] sm:$0x1]
        %v919 = vsel %vm567, %v913, 0.0
        %v920 = vsel %vm567, %v914, 0.0
        %v921 = vadd.f32 %v919, %v920
        %v922 = vsel %vm567, %v915, 0.0
        %v923 = vadd.f32 %v921, %v922
        %v924 = vsel %vm567, %v916, 0.0
        %v925 = vadd.f32 %v923, %v924
        %v926 = vrot.slane %v925, 4
        %v927 = vadd.f32 %v925, %v926
        %v928 = vrot.slane %v927, 2
        %v929 = vadd.f32 %v927, %v928
        %v930 = vrot.slane %v929, 1
        %v931 = vadd.f32 %v929, %v930
        %v932 = vmul.f32 %v931, 0.03125
        %v933 = vsub.f32 %v913, %v932
        %v934 = vsub.f32 %v914, %v932
        %v935 = vsub.f32 %v915, %v932
        %v936 = vsub.f32 %v916, %v932
        %v937 = vmul.f32 %v933, %v933
        %v938 = vmul.f32 %v934, %v934
        %v939 = vmul.f32 %v935, %v935
        %v940 = vmul.f32 %v936, %v936
        %v941 = vsel %vm567, %v937, 0.0
        %v942 = vsel %vm567, %v938, 0.0
        %v943 = vadd.f32 %v941, %v942
        %v944 = vsel %vm567, %v939, 0.0
        %v945 = vadd.f32 %v943, %v944
        %v946 = vsel %vm567, %v940, 0.0
        %v947 = vadd.f32 %v945, %v946
        %v948 = vrot.slane %v947, 4
        %v949 = vadd.f32 %v947, %v948
        %v950 = vrot.slane %v949, 2
        %v951 = vadd.f32 %v949, %v950
        %v952 = vrot.slane %v951, 1
        %v953 = vadd.f32 %v951, %v952
        %v954 = vmul.f32 %v953, 0.03125
        %v955 = vadd.f32 %v954, 1e-05
        %v956 = vrsqrt.pop %v955
        %v957 = vmul.f32 %v956, %v917
        %v958 = vlaneseq
        %v959 = vshrl.u32 %v958, 7
        %v960 = vsub.s32 0, %v959
        %v961 = vrot.slane %v957, %v960
        %v962 = vmul.f32 %v933, %v961
        %v963 = vmul.f32 %v934, %v961
        %v964 = vmul.f32 %v935, %v961
        %v965 = vmul.f32 %v936, %v961
        %v967 = vlaneseq
        %v968 = vshrl.u32 %v967, 7
        %v969 = vsub.s32 0, %v968
        %v970 = vrot.slane %v918, %v969
        %v972 = vadd.f32 %v962, %v970
        %v973 = vadd.f32 %v963, %v970
        %v974 = vadd.f32 %v964, %v970
        %v975 = vadd.f32 %v965, %v970
        %v976 = vmax.f32 %v972, 0.0
        %v977 = vmax.f32 %v973, 0.0
        %v978 = vmax.f32 %v974, 0.0
        %v979 = vmax.f32 %v975, 0.0
        %v980 = vpack.c.bf16 %v977, %v976
        %v981 = vpack.c.bf16 %v979, %v978
        %v983 = vshrl.u32 %v980, 16
        %v985 = vrot.slane %v983, 7
        %v986 = vshll.u32 %v980, 16
        %v988 = vor.u32 %v985, %v986
        %v990 = vshrl.u32 %v981, 16
        %v992 = vrot.slane %v990, 7
        %v993 = vshll.u32 %v981, 16
        %v995 = vor.u32 %v992, %v993
        %v998 = vsel %vm706, 0, %v988
        %v999 = vsel %vm706, 0, %v995
        %v1000 = vrot.slane %v986, 1
        %v1001 = vor.u32 %v983, %v1000
        %v1002 = vrot.slane %v993, 1
        %v1003 = vor.u32 %v990, %v1002
        %v1006 = vsel %vm717, %v1001, 0
        %v1007 = vsel %vm717, %v1003, 0
        %s1008 = scalar_lea.vmem %s457, 24 [#allocation8]
        %v1009 = vld [vmem:[%s1008] sm:$0xf]
        %v1010 = vld [vmem:[%s1008 + $0x4] sm:$0xf]
        %v1013 = vunpack.c.l.b16 %v1009
        %v1014 = vunpack.c.l.b16 %v1010
        %v1015 = vpack.c.b16 %v1014, %v1013
        %v1018 = vsel %vm567, %v998, 0
        %v1021 = vsel %vm567, %v999, 0
        %1023 = vmatprep.subr.bf16.mxu0 0
        %1024 = vmatpush1.bf16.msra.mxu0 %v1015
        %1025 = vmatprep.subr.bf16.mxu0 0
        %1026 = vmatpush1.bf16.msra.mxu0 0
        %1027 = vmatprep.subr.bf16.mxu0 0
        %1028 = vmatpush1.bf16.msra.mxu0 0
        %1029 = vmatprep.subr.bf16.mxu0 0
        %1030 = vmatpush1.bf16.msra.mxu0 0
        %1031 = vmatprep.subr.bf16.mxu0 0
        %1032 = vmatpush1.bf16.msra.mxu0 0
        %1033 = vmatprep.subr.bf16.mxu0 0
        %1034 = vmatpush1.bf16.msra.mxu0 0
        %1035 = vmatprep.subr.bf16.mxu0 0
        %1036 = vmatpush1.bf16.msra.mxu0 0
        %1037 = vmatprep.subr.bf16.mxu0 0
        %1038 = vmatpush1.bf16.msra.mxu0 0
        %1039 = vmatprep.subr.bf16.mxu0 0
        %1040 = vmatpush1.bf16.msra.mxu0 0
        %1041 = vmatprep.subr.bf16.mxu0 0
        %1042 = vmatpush1.bf16.msra.mxu0 0
        %1043 = vmatprep.subr.bf16.mxu0 0
        %1044 = vmatpush1.bf16.msra.mxu0 0
        %1045 = vmatprep.subr.bf16.mxu0 0
        %1046 = vmatpush1.bf16.msra.mxu0 0
        %1047 = vmatprep.subr.bf16.mxu0 0
        %1048 = vmatpush1.bf16.msra.mxu0 0
        %1049 = vmatprep.subr.bf16.mxu0 0
        %1050 = vmatpush1.bf16.msra.mxu0 0
        %1051 = vmatprep.subr.bf16.mxu0 0
        %1052 = vmatpush1.bf16.msra.mxu0 0
        %1053 = vmatprep.subr.bf16.mxu0 0
        %1054 = vmatpush1.bf16.msra.mxu0 0
        %1055 = vmatprep.mubr.bf16.mxu0 0
        %1056 = vmatmul.mubr.bf16.gmra.mrb[0].mxu0 %v1018
        %v1057 = vpop.f32.mrb[0].mxu0
        %v1058 = vadd.f32 0.0, %v1057
        %v1059 = vpop.f32.mrb[0].mxu0
        %v1060 = vpop.f32.mrb[0].mxu0
        %v1061 = vadd.f32 0.0, %v1060
        %v1062 = vpop.f32.mrb[0].mxu0
        %1063 = vmatprep.mubr.bf16.mxu0 0
        %1064 = vmatmul.mubr.bf16.gmra.mrb[0].mxu0 %v1021
        %v1065 = vpop.f32.mrb[0].mxu0
        %v1066 = vadd.f32 0.0, %v1065
        %v1067 = vpop.f32.mrb[0].mxu0
        %v1068 = vpop.f32.mrb[0].mxu0
        %v1069 = vadd.f32 0.0, %v1068
        %v1070 = vpop.f32.mrb[0].mxu0
        %1071 = vdwg.mxu0
        %s1072 = scalar_lea.vmem %s457, 32 [#allocation8]
        %v1073 = vld [vmem:[%s1072] sm:$0xf]
        %v1074 = vld [vmem:[%s1072 + $0x4] sm:$0xf]
        %v1077 = vunpack.c.l.b16 %v1073
        %v1078 = vunpack.c.l.b16 %v1074
        %v1079 = vpack.c.b16 %v1078, %v1077
        %v1081 = vsel %vm567, %v980, 0
        %v1083 = vsel %vm567, %v981, 0
        %1085 = vmatprep.subr.bf16.mxu0 0
        %1086 = vmatpush1.bf16.msra.mxu0 %v1079
        %1087 = vmatprep.subr.bf16.mxu0 0
        %1088 = vmatpush1.bf16.msra.mxu0 0
        %1089 = vmatprep.subr.bf16.mxu0 0
        %1090 = vmatpush1.bf16.msra.mxu0 0
        %1091 = vmatprep.subr.bf16.mxu0 0
        %1092 = vmatpush1.bf16.msra.mxu0 0
        %1093 = vmatprep.subr.bf16.mxu0 0
        %1094 = vmatpush1.bf16.msra.mxu0 0
        %1095 = vmatprep.subr.bf16.mxu0 0
        %1096 = vmatpush1.bf16.msra.mxu0 0
        %1097 = vmatprep.subr.bf16.mxu0 0
        %1098 = vmatpush1.bf16.msra.mxu0 0
        %1099 = vmatprep.subr.bf16.mxu0 0
        %1100 = vmatpush1.bf16.msra.mxu0 0
        %1101 = vmatprep.subr.bf16.mxu0 0
        %1102 = vmatpush1.bf16.msra.mxu0 0
        %1103 = vmatprep.subr.bf16.mxu0 0
        %1104 = vmatpush1.bf16.msra.mxu0 0
        %1105 = vmatprep.subr.bf16.mxu0 0
        %1106 = vmatpush1.bf16.msra.mxu0 0
        %1107 = vmatprep.subr.bf16.mxu0 0
        %1108 = vmatpush1.bf16.msra.mxu0 0
        %1109 = vmatprep.subr.bf16.mxu0 0
        %1110 = vmatpush1.bf16.msra.mxu0 0
        %1111 = vmatprep.subr.bf16.mxu0 0
        %1112 = vmatpush1.bf16.msra.mxu0 0
        %1113 = vmatprep.subr.bf16.mxu0 0
        %1114 = vmatpush1.bf16.msra.mxu0 0
        %1115 = vmatprep.subr.bf16.mxu0 0
        %1116 = vmatpush1.bf16.msra.mxu0 0
        %1117 = vmatprep.mubr.bf16.mxu0 0
        %1118 = vmatmul.mubr.bf16.gmra.mrb[0].mxu0 %v1081
        %v1119 = vpop.f32.mrb[0].mxu0
        %v1120 = vadd.f32 0.0, %v1119
        %v1121 = vpop.f32.mrb[0].mxu0
        %v1122 = vpop.f32.mrb[0].mxu0
        %v1123 = vadd.f32 0.0, %v1122
        %v1124 = vpop.f32.mrb[0].mxu0
        %1125 = vmatprep.mubr.bf16.mxu0 0
        %1126 = vmatmul.mubr.bf16.gmra.mrb[0].mxu0 %v1083
        %v1127 = vpop.f32.mrb[0].mxu0
        %v1128 = vadd.f32 0.0, %v1127
        %v1129 = vpop.f32.mrb[0].mxu0
        %v1130 = vpop.f32.mrb[0].mxu0
        %v1131 = vadd.f32 0.0, %v1130
        %v1132 = vpop.f32.mrb[0].mxu0
        %1133 = vdwg.mxu0
        %v1134 = vadd.f32 %v1058, %v1120
        %v1135 = vadd.f32 %v1061, %v1123
        %v1136 = vadd.f32 %v1066, %v1128
        %v1137 = vadd.f32 %v1069, %v1131
        %s1138 = scalar_lea.vmem %s457, 40 [#allocation8]
        %v1139 = vld [vmem:[%s1138] sm:$0xf]
        %v1140 = vld [vmem:[%s1138 + $0x4] sm:$0xf]
        %v1143 = vunpack.c.l.b16 %v1139
        %v1144 = vunpack.c.l.b16 %v1140
        %v1145 = vpack.c.b16 %v1144, %v1143
        %v1148 = vsel %vm567, %v1006, 0
        %v1151 = vsel %vm567, %v1007, 0
        %1153 = vmatprep.subr.bf16.mxu0 0
        %1154 = vmatpush1.bf16.msra.mxu0 %v1145
        %1155 = vmatprep.subr.bf16.mxu0 0
        %1156 = vmatpush1.bf16.msra.mxu0 0
        %1157 = vmatprep.subr.bf16.mxu0 0
        %1158 = vmatpush1.bf16.msra.mxu0 0
        %1159 = vmatprep.subr.bf16.mxu0 0
        %1160 = vmatpush1.bf16.msra.mxu0 0
        %1161 = vmatprep.subr.bf16.mxu0 0
        %1162 = vmatpush1.bf16.msra.mxu0 0
        %1163 = vmatprep.subr.bf16.mxu0 0
        %1164 = vmatpush1.bf16.msra.mxu0 0
        %1165 = vmatprep.subr.bf16.mxu0 0
        %1166 = vmatpush1.bf16.msra.mxu0 0
        %1167 = vmatprep.subr.bf16.mxu0 0
        %1168 = vmatpush1.bf16.msra.mxu0 0
        %1169 = vmatprep.subr.bf16.mxu0 0
        %1170 = vmatpush1.bf16.msra.mxu0 0
        %1171 = vmatprep.subr.bf16.mxu0 0
        %1172 = vmatpush1.bf16.msra.mxu0 0
        %1173 = vmatprep.subr.bf16.mxu0 0
        %1174 = vmatpush1.bf16.msra.mxu0 0
        %1175 = vmatprep.subr.bf16.mxu0 0
        %1176 = vmatpush1.bf16.msra.mxu0 0
        %1177 = vmatprep.subr.bf16.mxu0 0
        %1178 = vmatpush1.bf16.msra.mxu0 0
        %1179 = vmatprep.subr.bf16.mxu0 0
        %1180 = vmatpush1.bf16.msra.mxu0 0
        %1181 = vmatprep.subr.bf16.mxu0 0
        %1182 = vmatpush1.bf16.msra.mxu0 0
        %1183 = vmatprep.subr.bf16.mxu0 0
        %1184 = vmatpush1.bf16.msra.mxu0 0
        %1185 = vmatprep.mubr.bf16.mxu0 0
        %1186 = vmatmul.mubr.bf16.gmra.mrb[0].mxu0 %v1148
        %v1187 = vpop.f32.mrb[0].mxu0
        %v1188 = vadd.f32 0.0, %v1187
        %v1189 = vpop.f32.mrb[0].mxu0
        %v1190 = vpop.f32.mrb[0].mxu0
        %v1191 = vadd.f32 0.0, %v1190
        %v1192 = vpop.f32.mrb[0].mxu0
        %1193 = vmatprep.mubr.bf16.mxu0 0
        %1194 = vmatmul.mubr.bf16.gmra.mrb[0].mxu0 %v1151
        %v1195 = vpop.f32.mrb[0].mxu0
        %v1196 = vadd.f32 0.0, %v1195
        %v1197 = vpop.f32.mrb[0].mxu0
        %v1198 = vpop.f32.mrb[0].mxu0
        %v1199 = vadd.f32 0.0, %v1198
        %v1200 = vpop.f32.mrb[0].mxu0
        %1201 = vdwg.mxu0
        %v1202 = vadd.f32 %v1134, %v1188
        %v1203 = vadd.f32 %v1135, %v1191
        %v1204 = vadd.f32 %v1136, %v1196
        %v1205 = vadd.f32 %v1137, %v1199
        %s1206 = scalar_lea.vmem %s531, 1
        %v1207 = vld [vmem:[%s1206] sm:$0x1]
        %s1208 = scalar_lea.vmem %s535, 1
        %v1209 = vld [vmem:[%s1208] sm:$0x1]
        %v1210 = vsel %vm567, %v1202, 0.0
        %v1211 = vsel %vm567, %v1203, 0.0
        %v1212 = vadd.f32 %v1210, %v1211
        %v1213 = vsel %vm567, %v1204, 0.0
        %v1214 = vadd.f32 %v1212, %v1213
        %v1215 = vsel %vm567, %v1205, 0.0
        %v1216 = vadd.f32 %v1214, %v1215
        %v1217 = vrot.slane %v1216, 4
        %v1218 = vadd.f32 %v1216, %v1217
        %v1219 = vrot.slane %v1218, 2
        %v1220 = vadd.f32 %v1218, %v1219
        %v1221 = vrot.slane %v1220, 1
        %v1222 = vadd.f32 %v1220, %v1221
        %v1223 = vmul.f32 %v1222, 0.03125
        %v1224 = vsub.f32 %v1202, %v1223
        %v1225 = vsub.f32 %v1203, %v1223
        %v1226 = vsub.f32 %v1204, %v1223
        %v1227 = vsub.f32 %v1205, %v1223
        %v1228 = vmul.f32 %v1224, %v1224
        %v1229 = vmul.f32 %v1225, %v1225
        %v1230 = vmul.f32 %v1226, %v1226
        %v1231 = vmul.f32 %v1227, %v1227
        %v1232 = vsel %vm567, %v1228, 0.0
        %v1233 = vsel %vm567, %v1229, 0.0
        %v1234 = vadd.f32 %v1232, %v1233
        %v1235 = vsel %vm567, %v1230, 0.0
        %v1236 = vadd.f32 %v1234, %v1235
        %v1237 = vsel %vm567, %v1231, 0.0
        %v1238 = vadd.f32 %v1236, %v1237
        %v1239 = vrot.slane %v1238, 4
        %v1240 = vadd.f32 %v1238, %v1239
        %v1241 = vrot.slane %v1240, 2
        %v1242 = vadd.f32 %v1240, %v1241
        %v1243 = vrot.slane %v1242, 1
        %v1244 = vadd.f32 %v1242, %v1243
        %v1245 = vmul.f32 %v1244, 0.03125
        %v1246 = vadd.f32 %v1245, 1e-05
        %v1247 = vrsqrt.pop %v1246
        %v1248 = vmul.f32 %v1247, %v1207
        %v1249 = vlaneseq
        %v1250 = vshrl.u32 %v1249, 7
        %v1251 = vsub.s32 0, %v1250
        %v1252 = vrot.slane %v1248, %v1251
        %v1253 = vmul.f32 %v1224, %v1252
        %v1254 = vmul.f32 %v1225, %v1252
        %v1255 = vmul.f32 %v1226, %v1252
        %v1256 = vmul.f32 %v1227, %v1252
        %v1258 = vlaneseq
        %v1259 = vshrl.u32 %v1258, 7
        %v1260 = vsub.s32 0, %v1259
        %v1261 = vrot.slane %v1209, %v1260
        %v1263 = vadd.f32 %v1253, %v1261
        %v1264 = vadd.f32 %v1254, %v1261
        %v1265 = vadd.f32 %v1255, %v1261
        %v1266 = vadd.f32 %v1256, %v1261
        %v1267 = vadd.f32 %v1263, %v682
        %v1268 = vadd.f32 %v1264, %v683
        %v1269 = vadd.f32 %v1265, %v684
        %v1270 = vadd.f32 %v1266, %v685
        %v1271 = vmax.f32 %v1267, 0.0
        %v1272 = vmax.f32 %v1268, 0.0
        %v1273 = vmax.f32 %v1269, 0.0
        %v1274 = vmax.f32 %v1270, 0.0
        %v1275 = vld [vmem:[%s539] sm:$0x1]
        %v1276 = vld [vmem:[%s543] sm:$0x1]
        %v1277 = vsel %vm567, %v1271, 0.0
        %v1278 = vsel %vm567, %v1272, 0.0
        %v1279 = vadd.f32 %v1277, %v1278
        %v1280 = vsel %vm567, %v1273, 0.0
        %v1281 = vadd.f32 %v1279, %v1280
        %v1282 = vsel %vm567, %v1274, 0.0
        %v1283 = vadd.f32 %v1281, %v1282
        %v1284 = vrot.slane %v1283, 4
        %v1285 = vadd.f32 %v1283, %v1284
        %v1286 = vrot.slane %v1285, 2
        %v1287 = vadd.f32 %v1285, %v1286
        %v1288 = vrot.slane %v1287, 1
        %v1289 = vadd.f32 %v1287, %v1288
        %v1290 = vmul.f32 %v1289, 0.03125
        %v1291 = vsub.f32 %v1271, %v1290
        %v1292 = vsub.f32 %v1272, %v1290
        %v1293 = vsub.f32 %v1273, %v1290
        %v1294 = vsub.f32 %v1274, %v1290
        %v1295 = vmul.f32 %v1291, %v1291
        %v1296 = vmul.f32 %v1292, %v1292
        %v1297 = vmul.f32 %v1293, %v1293
        %v1298 = vmul.f32 %v1294, %v1294
        %v1299 = vsel %vm567, %v1295, 0.0
        %v1300 = vsel %vm567, %v1296, 0.0
        %v1301 = vadd.f32 %v1299, %v1300
        %v1302 = vsel %vm567, %v1297, 0.0
        %v1303 = vadd.f32 %v1301, %v1302
        %v1304 = vsel %vm567, %v1298, 0.0
        %v1305 = vadd.f32 %v1303, %v1304
        %v1306 = vrot.slane %v1305, 4
        %v1307 = vadd.f32 %v1305, %v1306
        %v1308 = vrot.slane %v1307, 2
        %v1309 = vadd.f32 %v1307, %v1308
        %v1310 = vrot.slane %v1309, 1
        %v1311 = vadd.f32 %v1309, %v1310
        %v1312 = vmul.f32 %v1311, 0.03125
        %v1313 = vadd.f32 %v1312, 1e-05
        %v1314 = vrsqrt.pop %v1313
        %v1315 = vmul.f32 %v1314, %v1275
        %v1316 = vlaneseq
        %v1317 = vshrl.u32 %v1316, 7
        %v1318 = vsub.s32 0, %v1317
        %v1319 = vrot.slane %v1315, %v1318
        %v1320 = vmul.f32 %v1291, %v1319
        %v1321 = vmul.f32 %v1292, %v1319
        %v1322 = vmul.f32 %v1293, %v1319
        %v1323 = vmul.f32 %v1294, %v1319
        %v1325 = vlaneseq
        %v1326 = vshrl.u32 %v1325, 7
        %v1327 = vsub.s32 0, %v1326
        %v1328 = vrot.slane %v1276, %v1327
        %v1330 = vadd.f32 %v1320, %v1328
        %v1331 = vadd.f32 %v1321, %v1328
        %v1332 = vadd.f32 %v1322, %v1328
        %v1333 = vadd.f32 %v1323, %v1328
        %v1334 = vsel %vm567, %v1330, -inf
        %v1335 = vsel %vm567, %v1331, -inf
        %v1336 = vmax.f32 %v1334, %v1335
        %v1337 = vrot.slane %v1336, 4
        %v1338 = vmax.f32 %v1336, %v1337
        %v1339 = vrot.slane %v1338, 2
        %v1340 = vmax.f32 %v1338, %v1339
        %v1341 = vrot.slane %v1340, 1
        %v1342 = vmax.f32 %v1340, %v1341
        %v1343 = vsel %vm567, %v1332, -inf
        %v1344 = vsel %vm567, %v1333, -inf
        %v1345 = vmax.f32 %v1343, %v1344
        %v1346 = vrot.slane %v1345, 4
        %v1347 = vmax.f32 %v1345, %v1346
        %v1348 = vrot.slane %v1347, 2
        %v1349 = vmax.f32 %v1347, %v1348
        %v1350 = vrot.slane %v1349, 1
        %v1351 = vmax.f32 %v1349, %v1350
        %vm1354 = vcmask 1041409
        %v1355 = vsel %vm1354, %v1351, %v1342
        %vm1357 = vcmask 123904
        %1358 = vst.msk [vmem:[%s524] sm:$0x3] %vm1357, %v1355
        %v1359 = vpack.c.bf16 %v1272, %v1271
        %v1360 = vpack.c.bf16 %v1274, %v1273
        %v1362 = vshrl.u32 %v1359, 16
        %v1364 = vrot.slane %v1362, 7
        %v1365 = vshll.u32 %v1359, 16
        %v1367 = vor.u32 %v1364, %v1365
        %v1369 = vshrl.u32 %v1360, 16
        %v1371 = vrot.slane %v1369, 7
        %v1372 = vshll.u32 %v1360, 16
        %v1374 = vor.u32 %v1371, %v1372
        %v1377 = vsel %vm706, 0, %v1367
        %v1378 = vsel %vm706, 0, %v1374
        %v1379 = vrot.slane %v1365, 1
        %v1380 = vor.u32 %v1362, %v1379
        %v1381 = vrot.slane %v1372, 1
        %v1382 = vor.u32 %v1369, %v1381
        %v1385 = vsel %vm717, %v1380, 0
        %v1386 = vsel %vm717, %v1382, 0
        %s1387 = scalar_lea.vmem %s457, 48 [#allocation8]
        %v1388 = vld [vmem:[%s1387] sm:$0xf]
        %v1389 = vld [vmem:[%s1387 + $0x4] sm:$0xf]
        %v1392 = vunpack.c.l.b16 %v1388
        %v1393 = vunpack.c.l.b16 %v1389
        %v1394 = vpack.c.b16 %v1393, %v1392
        %v1397 = vsel %vm567, %v1377, 0
        %v1400 = vsel %vm567, %v1378, 0
        %1402 = vmatprep.subr.bf16.mxu0 0
        %1403 = vmatpush1.bf16.msra.mxu0 %v1394
        %1404 = vmatprep.subr.bf16.mxu0 0
        %1405 = vmatpush1.bf16.msra.mxu0 0
        %1406 = vmatprep.subr.bf16.mxu0 0
        %1407 = vmatpush1.bf16.msra.mxu0 0
        %1408 = vmatprep.subr.bf16.mxu0 0
        %1409 = vmatpush1.bf16.msra.mxu0 0
        %1410 = vmatprep.subr.bf16.mxu0 0
        %1411 = vmatpush1.bf16.msra.mxu0 0
        %1412 = vmatprep.subr.bf16.mxu0 0
        %1413 = vmatpush1.bf16.msra.mxu0 0
        %1414 = vmatprep.subr.bf16.mxu0 0
        %1415 = vmatpush1.bf16.msra.mxu0 0
        %1416 = vmatprep.subr.bf16.mxu0 0
        %1417 = vmatpush1.bf16.msra.mxu0 0
        %1418 = vmatprep.subr.bf16.mxu0 0
        %1419 = vmatpush1.bf16.msra.mxu0 0
        %1420 = vmatprep.subr.bf16.mxu0 0
        %1421 = vmatpush1.bf16.msra.mxu0 0
        %1422 = vmatprep.subr.bf16.mxu0 0
        %1423 = vmatpush1.bf16.msra.mxu0 0
        %1424 = vmatprep.subr.bf16.mxu0 0
        %1425 = vmatpush1.bf16.msra.mxu0 0
        %1426 = vmatprep.subr.bf16.mxu0 0
        %1427 = vmatpush1.bf16.msra.mxu0 0
        %1428 = vmatprep.subr.bf16.mxu0 0
        %1429 = vmatpush1.bf16.msra.mxu0 0
        %1430 = vmatprep.subr.bf16.mxu0 0
        %1431 = vmatpush1.bf16.msra.mxu0 0
        %1432 = vmatprep.subr.bf16.mxu0 0
        %1433 = vmatpush1.bf16.msra.mxu0 0
        %1434 = vmatprep.mubr.bf16.mxu0 0
        %1435 = vmatmul.mubr.bf16.gmra.mrb[0].mxu0 %v1397
        %v1436 = vpop.f32.mrb[0].mxu0
        %v1437 = vadd.f32 0.0, %v1436
        %v1438 = vpop.f32.mrb[0].mxu0
        %v1439 = vpop.f32.mrb[0].mxu0
        %v1440 = vadd.f32 0.0, %v1439
        %v1441 = vpop.f32.mrb[0].mxu0
        %1442 = vmatprep.mubr.bf16.mxu0 0
        %1443 = vmatmul.mubr.bf16.gmra.mrb[0].mxu0 %v1400
        %v1444 = vpop.f32.mrb[0].mxu0
        %v1445 = vadd.f32 0.0, %v1444
        %v1446 = vpop.f32.mrb[0].mxu0
        %v1447 = vpop.f32.mrb[0].mxu0
        %v1448 = vadd.f32 0.0, %v1447
        %v1449 = vpop.f32.mrb[0].mxu0
        %1450 = vdwg.mxu0
        %s1451 = scalar_lea.vmem %s457, 56 [#allocation8]
        %v1452 = vld [vmem:[%s1451] sm:$0xf]
        %v1453 = vld [vmem:[%s1451 + $0x4] sm:$0xf]
        %v1456 = vunpack.c.l.b16 %v1452
        %v1457 = vunpack.c.l.b16 %v1453
        %v1458 = vpack.c.b16 %v1457, %v1456
        %v1460 = vsel %vm567, %v1359, 0
        %v1462 = vsel %vm567, %v1360, 0
        %1464 = vmatprep.subr.bf16.mxu0 0
        %1465 = vmatpush1.bf16.msra.mxu0 %v1458
        %1466 = vmatprep.subr.bf16.mxu0 0
        %1467 = vmatpush1.bf16.msra.mxu0 0
        %1468 = vmatprep.subr.bf16.mxu0 0
        %1469 = vmatpush1.bf16.msra.mxu0 0
        %1470 = vmatprep.subr.bf16.mxu0 0
        %1471 = vmatpush1.bf16.msra.mxu0 0
        %1472 = vmatprep.subr.bf16.mxu0 0
        %1473 = vmatpush1.bf16.msra.mxu0 0
        %1474 = vmatprep.subr.bf16.mxu0 0
        %1475 = vmatpush1.bf16.msra.mxu0 0
        %1476 = vmatprep.subr.bf16.mxu0 0
        %1477 = vmatpush1.bf16.msra.mxu0 0
        %1478 = vmatprep.subr.bf16.mxu0 0
        %1479 = vmatpush1.bf16.msra.mxu0 0
        %1480 = vmatprep.subr.bf16.mxu0 0
        %1481 = vmatpush1.bf16.msra.mxu0 0
        %1482 = vmatprep.subr.bf16.mxu0 0
        %1483 = vmatpush1.bf16.msra.mxu0 0
        %1484 = vmatprep.subr.bf16.mxu0 0
        %1485 = vmatpush1.bf16.msra.mxu0 0
        %1486 = vmatprep.subr.bf16.mxu0 0
        %1487 = vmatpush1.bf16.msra.mxu0 0
        %1488 = vmatprep.subr.bf16.mxu0 0
        %1489 = vmatpush1.bf16.msra.mxu0 0
        %1490 = vmatprep.subr.bf16.mxu0 0
        %1491 = vmatpush1.bf16.msra.mxu0 0
        %1492 = vmatprep.subr.bf16.mxu0 0
        %1493 = vmatpush1.bf16.msra.mxu0 0
        %1494 = vmatprep.subr.bf16.mxu0 0
        %1495 = vmatpush1.bf16.msra.mxu0 0
        %1496 = vmatprep.mubr.bf16.mxu0 0
        %1497 = vmatmul.mubr.bf16.gmra.mrb[0].mxu0 %v1460
        %v1498 = vpop.f32.mrb[0].mxu0
        %v1499 = vadd.f32 0.0, %v1498
        %v1500 = vpop.f32.mrb[0].mxu0
        %v1501 = vpop.f32.mrb[0].mxu0
        %v1502 = vadd.f32 0.0, %v1501
        %v1503 = vpop.f32.mrb[0].mxu0
        %1504 = vmatprep.mubr.bf16.mxu0 0
        %1505 = vmatmul.mubr.bf16.gmra.mrb[0].mxu0 %v1462
        %v1506 = vpop.f32.mrb[0].mxu0
        %v1507 = vadd.f32 0.0, %v1506
        %v1508 = vpop.f32.mrb[0].mxu0
        %v1509 = vpop.f32.mrb[0].mxu0
        %v1510 = vadd.f32 0.0, %v1509
        %v1511 = vpop.f32.mrb[0].mxu0
        %1512 = vdwg.mxu0
        %v1513 = vadd.f32 %v1437, %v1499
        %v1514 = vadd.f32 %v1440, %v1502
        %v1515 = vadd.f32 %v1445, %v1507
        %v1516 = vadd.f32 %v1448, %v1510
        %s1517 = scalar_lea.vmem %s457, 64 [#allocation8]
        %v1518 = vld [vmem:[%s1517] sm:$0xf]
        %v1519 = vld [vmem:[%s1517 + $0x4] sm:$0xf]
        %v1522 = vunpack.c.l.b16 %v1518
        %v1523 = vunpack.c.l.b16 %v1519
        %v1524 = vpack.c.b16 %v1523, %v1522
        %v1527 = vsel %vm567, %v1385, 0
        %v1530 = vsel %vm567, %v1386, 0
        %1532 = vmatprep.subr.bf16.mxu0 0
        %1533 = vmatpush1.bf16.msra.mxu0 %v1524
        %1534 = vmatprep.subr.bf16.mxu0 0
        %1535 = vmatpush1.bf16.msra.mxu0 0
        %1536 = vmatprep.subr.bf16.mxu0 0
        %1537 = vmatpush1.bf16.msra.mxu0 0
        %1538 = vmatprep.subr.bf16.mxu0 0
        %1539 = vmatpush1.bf16.msra.mxu0 0
        %1540 = vmatprep.subr.bf16.mxu0 0
        %1541 = vmatpush1.bf16.msra.mxu0 0
        %1542 = vmatprep.subr.bf16.mxu0 0
        %1543 = vmatpush1.bf16.msra.mxu0 0
        %1544 = vmatprep.subr.bf16.mxu0 0
        %1545 = vmatpush1.bf16.msra.mxu0 0
        %1546 = vmatprep.subr.bf16.mxu0 0
        %1547 = vmatpush1.bf16.msra.mxu0 0
        %1548 = vmatprep.subr.bf16.mxu0 0
        %1549 = vmatpush1.bf16.msra.mxu0 0
        %1550 = vmatprep.subr.bf16.mxu0 0
        %1551 = vmatpush1.bf16.msra.mxu0 0
        %1552 = vmatprep.subr.bf16.mxu0 0
        %1553 = vmatpush1.bf16.msra.mxu0 0
        %1554 = vmatprep.subr.bf16.mxu0 0
        %1555 = vmatpush1.bf16.msra.mxu0 0
        %1556 = vmatprep.subr.bf16.mxu0 0
        %1557 = vmatpush1.bf16.msra.mxu0 0
        %1558 = vmatprep.subr.bf16.mxu0 0
        %1559 = vmatpush1.bf16.msra.mxu0 0
        %1560 = vmatprep.subr.bf16.mxu0 0
        %1561 = vmatpush1.bf16.msra.mxu0 0
        %1562 = vmatprep.subr.bf16.mxu0 0
        %1563 = vmatpush1.bf16.msra.mxu0 0
        %1564 = vmatprep.mubr.bf16.mxu0 0
        %1565 = vmatmul.mubr.bf16.gmra.mrb[0].mxu0 %v1527
        %v1566 = vpop.f32.mrb[0].mxu0
        %v1567 = vadd.f32 0.0, %v1566
        %v1568 = vpop.f32.mrb[0].mxu0
        %v1569 = vpop.f32.mrb[0].mxu0
        %v1570 = vadd.f32 0.0, %v1569
        %v1571 = vpop.f32.mrb[0].mxu0
        %1572 = vmatprep.mubr.bf16.mxu0 0
        %1573 = vmatmul.mubr.bf16.gmra.mrb[0].mxu0 %v1530
        %v1574 = vpop.f32.mrb[0].mxu0
        %v1575 = vadd.f32 0.0, %v1574
        %v1576 = vpop.f32.mrb[0].mxu0
        %v1577 = vpop.f32.mrb[0].mxu0
        %v1578 = vadd.f32 0.0, %v1577
        %v1579 = vpop.f32.mrb[0].mxu0
        %1580 = vdwg.mxu0
        %v1581 = vadd.f32 %v1513, %v1567
        %v1582 = vadd.f32 %v1514, %v1570
        %v1583 = vadd.f32 %v1515, %v1575
        %v1584 = vadd.f32 %v1516, %v1578
        %s1585 = scalar_lea.vmem %s531, 2
        %v1586 = vld [vmem:[%s1585] sm:$0x1]
        %s1587 = scalar_lea.vmem %s535, 2
        %v1588 = vld [vmem:[%s1587] sm:$0x1]
        %v1589 = vsel %vm567, %v1581, 0.0
        %v1590 = vsel %vm567, %v1582, 0.0
        %v1591 = vadd.f32 %v1589, %v1590
        %v1592 = vsel %vm567, %v1583, 0.0
        %v1593 = vadd.f32 %v1591, %v1592
        %v1594 = vsel %vm567, %v1584, 0.0
        %v1595 = vadd.f32 %v1593, %v1594
        %v1596 = vrot.slane %v1595, 4
        %v1597 = vadd.f32 %v1595, %v1596
        %v1598 = vrot.slane %v1597, 2
        %v1599 = vadd.f32 %v1597, %v1598
        %v1600 = vrot.slane %v1599, 1
        %v1601 = vadd.f32 %v1599, %v1600
        %v1602 = vmul.f32 %v1601, 0.03125
        %v1603 = vsub.f32 %v1581, %v1602
        %v1604 = vsub.f32 %v1582, %v1602
        %v1605 = vsub.f32 %v1583, %v1602
        %v1606 = vsub.f32 %v1584, %v1602
        %v1607 = vmul.f32 %v1603, %v1603
        %v1608 = vmul.f32 %v1604, %v1604
        %v1609 = vmul.f32 %v1605, %v1605
        %v1610 = vmul.f32 %v1606, %v1606
        %v1611 = vsel %vm567, %v1607, 0.0
        %v1612 = vsel %vm567, %v1608, 0.0
        %v1613 = vadd.f32 %v1611, %v1612
        %v1614 = vsel %vm567, %v1609, 0.0
        %v1615 = vadd.f32 %v1613, %v1614
        %v1616 = vsel %vm567, %v1610, 0.0
        %v1617 = vadd.f32 %v1615, %v1616
        %v1618 = vrot.slane %v1617, 4
        %v1619 = vadd.f32 %v1617, %v1618
        %v1620 = vrot.slane %v1619, 2
        %v1621 = vadd.f32 %v1619, %v1620
        %v1622 = vrot.slane %v1621, 1
        %v1623 = vadd.f32 %v1621, %v1622
        %v1624 = vmul.f32 %v1623, 0.03125
        %v1625 = vadd.f32 %v1624, 1e-05
        %v1626 = vrsqrt.pop %v1625
        %v1627 = vmul.f32 %v1626, %v1586
        %v1628 = vlaneseq
        %v1629 = vshrl.u32 %v1628, 7
        %v1630 = vsub.s32 0, %v1629
        %v1631 = vrot.slane %v1627, %v1630
        %v1632 = vmul.f32 %v1603, %v1631
        %v1633 = vmul.f32 %v1604, %v1631
        %v1634 = vmul.f32 %v1605, %v1631
        %v1635 = vmul.f32 %v1606, %v1631
        %v1637 = vlaneseq
        %v1638 = vshrl.u32 %v1637, 7
        %v1639 = vsub.s32 0, %v1638
        %v1640 = vrot.slane %v1588, %v1639
        %v1642 = vadd.f32 %v1632, %v1640
        %v1643 = vadd.f32 %v1633, %v1640
        %v1644 = vadd.f32 %v1634, %v1640
        %v1645 = vadd.f32 %v1635, %v1640
        %v1646 = vmax.f32 %v1642, 0.0
        %v1647 = vmax.f32 %v1643, 0.0
        %v1648 = vmax.f32 %v1644, 0.0
        %v1649 = vmax.f32 %v1645, 0.0
        %v1650 = vpack.c.bf16 %v1647, %v1646
        %v1651 = vpack.c.bf16 %v1649, %v1648
        %v1653 = vshrl.u32 %v1650, 16
        %v1655 = vrot.slane %v1653, 7
        %v1656 = vshll.u32 %v1650, 16
        %v1658 = vor.u32 %v1655, %v1656
        %v1660 = vshrl.u32 %v1651, 16
        %v1662 = vrot.slane %v1660, 7
        %v1663 = vshll.u32 %v1651, 16
        %v1665 = vor.u32 %v1662, %v1663
        %v1668 = vsel %vm706, 0, %v1658
        %v1669 = vsel %vm706, 0, %v1665
        %v1670 = vrot.slane %v1656, 1
        %v1671 = vor.u32 %v1653, %v1670
        %v1672 = vrot.slane %v1663, 1
        %v1673 = vor.u32 %v1660, %v1672
        %v1676 = vsel %vm717, %v1671, 0
        %v1677 = vsel %vm717, %v1673, 0
        %s1678 = scalar_lea.vmem %s457, 72 [#allocation8]
        %v1679 = vld [vmem:[%s1678] sm:$0xf]
        %v1680 = vld [vmem:[%s1678 + $0x4] sm:$0xf]
        %v1683 = vunpack.c.l.b16 %v1679
        %v1684 = vunpack.c.l.b16 %v1680
        %v1685 = vpack.c.b16 %v1684, %v1683
        %v1688 = vsel %vm567, %v1668, 0
        %v1691 = vsel %vm567, %v1669, 0
        %1693 = vmatprep.subr.bf16.mxu0 0
        %1694 = vmatpush1.bf16.msra.mxu0 %v1685
        %1695 = vmatprep.subr.bf16.mxu0 0
        %1696 = vmatpush1.bf16.msra.mxu0 0
        %1697 = vmatprep.subr.bf16.mxu0 0
        %1698 = vmatpush1.bf16.msra.mxu0 0
        %1699 = vmatprep.subr.bf16.mxu0 0
        %1700 = vmatpush1.bf16.msra.mxu0 0
        %1701 = vmatprep.subr.bf16.mxu0 0
        %1702 = vmatpush1.bf16.msra.mxu0 0
        %1703 = vmatprep.subr.bf16.mxu0 0
        %1704 = vmatpush1.bf16.msra.mxu0 0
        %1705 = vmatprep.subr.bf16.mxu0 0
        %1706 = vmatpush1.bf16.msra.mxu0 0
        %1707 = vmatprep.subr.bf16.mxu0 0
        %1708 = vmatpush1.bf16.msra.mxu0 0
        %1709 = vmatprep.subr.bf16.mxu0 0
        %1710 = vmatpush1.bf16.msra.mxu0 0
        %1711 = vmatprep.subr.bf16.mxu0 0
        %1712 = vmatpush1.bf16.msra.mxu0 0
        %1713 = vmatprep.subr.bf16.mxu0 0
        %1714 = vmatpush1.bf16.msra.mxu0 0
        %1715 = vmatprep.subr.bf16.mxu0 0
        %1716 = vmatpush1.bf16.msra.mxu0 0
        %1717 = vmatprep.subr.bf16.mxu0 0
        %1718 = vmatpush1.bf16.msra.mxu0 0
        %1719 = vmatprep.subr.bf16.mxu0 0
        %1720 = vmatpush1.bf16.msra.mxu0 0
        %1721 = vmatprep.subr.bf16.mxu0 0
        %1722 = vmatpush1.bf16.msra.mxu0 0
        %1723 = vmatprep.subr.bf16.mxu0 0
        %1724 = vmatpush1.bf16.msra.mxu0 0
        %1725 = vmatprep.mubr.bf16.mxu0 0
        %1726 = vmatmul.mubr.bf16.gmra.mrb[0].mxu0 %v1688
        %v1727 = vpop.f32.mrb[0].mxu0
        %v1728 = vadd.f32 0.0, %v1727
        %v1729 = vpop.f32.mrb[0].mxu0
        %v1730 = vpop.f32.mrb[0].mxu0
        %v1731 = vadd.f32 0.0, %v1730
        %v1732 = vpop.f32.mrb[0].mxu0
        %1733 = vmatprep.mubr.bf16.mxu0 0
        %1734 = vmatmul.mubr.bf16.gmra.mrb[0].mxu0 %v1691
        %v1735 = vpop.f32.mrb[0].mxu0
        %v1736 = vadd.f32 0.0, %v1735
        %v1737 = vpop.f32.mrb[0].mxu0
        %v1738 = vpop.f32.mrb[0].mxu0
        %v1739 = vadd.f32 0.0, %v1738
        %v1740 = vpop.f32.mrb[0].mxu0
        %1741 = vdwg.mxu0
        %s1742 = scalar_lea.vmem %s457, 80 [#allocation8]
        %v1743 = vld [vmem:[%s1742] sm:$0xf]
        %v1744 = vld [vmem:[%s1742 + $0x4] sm:$0xf]
        %v1747 = vunpack.c.l.b16 %v1743
        %v1748 = vunpack.c.l.b16 %v1744
        %v1749 = vpack.c.b16 %v1748, %v1747
        %v1751 = vsel %vm567, %v1650, 0
        %v1753 = vsel %vm567, %v1651, 0
        %1755 = vmatprep.subr.bf16.mxu0 0
        %1756 = vmatpush1.bf16.msra.mxu0 %v1749
        %1757 = vmatprep.subr.bf16.mxu0 0
        %1758 = vmatpush1.bf16.msra.mxu0 0
        %1759 = vmatprep.subr.bf16.mxu0 0
        %1760 = vmatpush1.bf16.msra.mxu0 0
        %1761 = vmatprep.subr.bf16.mxu0 0
        %1762 = vmatpush1.bf16.msra.mxu0 0
        %1763 = vmatprep.subr.bf16.mxu0 0
        %1764 = vmatpush1.bf16.msra.mxu0 0
        %1765 = vmatprep.subr.bf16.mxu0 0
        %1766 = vmatpush1.bf16.msra.mxu0 0
        %1767 = vmatprep.subr.bf16.mxu0 0
        %1768 = vmatpush1.bf16.msra.mxu0 0
        %1769 = vmatprep.subr.bf16.mxu0 0
        %1770 = vmatpush1.bf16.msra.mxu0 0
        %1771 = vmatprep.subr.bf16.mxu0 0
        %1772 = vmatpush1.bf16.msra.mxu0 0
        %1773 = vmatprep.subr.bf16.mxu0 0
        %1774 = vmatpush1.bf16.msra.mxu0 0
        %1775 = vmatprep.subr.bf16.mxu0 0
        %1776 = vmatpush1.bf16.msra.mxu0 0
        %1777 = vmatprep.subr.bf16.mxu0 0
        %1778 = vmatpush1.bf16.msra.mxu0 0
        %1779 = vmatprep.subr.bf16.mxu0 0
        %1780 = vmatpush1.bf16.msra.mxu0 0
        %1781 = vmatprep.subr.bf16.mxu0 0
        %1782 = vmatpush1.bf16.msra.mxu0 0
        %1783 = vmatprep.subr.bf16.mxu0 0
        %1784 = vmatpush1.bf16.msra.mxu0 0
        %1785 = vmatprep.subr.bf16.mxu0 0
        %1786 = vmatpush1.bf16.msra.mxu0 0
        %1787 = vmatprep.mubr.bf16.mxu0 0
        %1788 = vmatmul.mubr.bf16.gmra.mrb[0].mxu0 %v1751
        %v1789 = vpop.f32.mrb[0].mxu0
        %v1790 = vadd.f32 0.0, %v1789
        %v1791 = vpop.f32.mrb[0].mxu0
        %v1792 = vpop.f32.mrb[0].mxu0
        %v1793 = vadd.f32 0.0, %v1792
        %v1794 = vpop.f32.mrb[0].mxu0
        %1795 = vmatprep.mubr.bf16.mxu0 0
        %1796 = vmatmul.mubr.bf16.gmra.mrb[0].mxu0 %v1753
        %v1797 = vpop.f32.mrb[0].mxu0
        %v1798 = vadd.f32 0.0, %v1797
        %v1799 = vpop.f32.mrb[0].mxu0
        %v1800 = vpop.f32.mrb[0].mxu0
        %v1801 = vadd.f32 0.0, %v1800
        %v1802 = vpop.f32.mrb[0].mxu0
        %1803 = vdwg.mxu0
        %v1804 = vadd.f32 %v1728, %v1790
        %v1805 = vadd.f32 %v1731, %v1793
        %v1806 = vadd.f32 %v1736, %v1798
        %v1807 = vadd.f32 %v1739, %v1801
        %s1808 = scalar_lea.vmem %s457, 88 [#allocation8]
        %v1809 = vld [vmem:[%s1808] sm:$0xf]
        %v1810 = vld [vmem:[%s1808 + $0x4] sm:$0xf]
        %v1813 = vunpack.c.l.b16 %v1809
        %v1814 = vunpack.c.l.b16 %v1810
        %v1815 = vpack.c.b16 %v1814, %v1813
        %v1818 = vsel %vm567, %v1676, 0
        %v1821 = vsel %vm567, %v1677, 0
        %1823 = vmatprep.subr.bf16.mxu0 0
        %1824 = vmatpush1.bf16.msra.mxu0 %v1815
        %1825 = vmatprep.subr.bf16.mxu0 0
        %1826 = vmatpush1.bf16.msra.mxu0 0
        %1827 = vmatprep.subr.bf16.mxu0 0
        %1828 = vmatpush1.bf16.msra.mxu0 0
        %1829 = vmatprep.subr.bf16.mxu0 0
        %1830 = vmatpush1.bf16.msra.mxu0 0
        %1831 = vmatprep.subr.bf16.mxu0 0
        %1832 = vmatpush1.bf16.msra.mxu0 0
        %1833 = vmatprep.subr.bf16.mxu0 0
        %1834 = vmatpush1.bf16.msra.mxu0 0
        %1835 = vmatprep.subr.bf16.mxu0 0
        %1836 = vmatpush1.bf16.msra.mxu0 0
        %1837 = vmatprep.subr.bf16.mxu0 0
        %1838 = vmatpush1.bf16.msra.mxu0 0
        %1839 = vmatprep.subr.bf16.mxu0 0
        %1840 = vmatpush1.bf16.msra.mxu0 0
        %1841 = vmatprep.subr.bf16.mxu0 0
        %1842 = vmatpush1.bf16.msra.mxu0 0
        %1843 = vmatprep.subr.bf16.mxu0 0
        %1844 = vmatpush1.bf16.msra.mxu0 0
        %1845 = vmatprep.subr.bf16.mxu0 0
        %1846 = vmatpush1.bf16.msra.mxu0 0
        %1847 = vmatprep.subr.bf16.mxu0 0
        %1848 = vmatpush1.bf16.msra.mxu0 0
        %1849 = vmatprep.subr.bf16.mxu0 0
        %1850 = vmatpush1.bf16.msra.mxu0 0
        %1851 = vmatprep.subr.bf16.mxu0 0
        %1852 = vmatpush1.bf16.msra.mxu0 0
        %1853 = vmatprep.subr.bf16.mxu0 0
        %1854 = vmatpush1.bf16.msra.mxu0 0
        %1855 = vmatprep.mubr.bf16.mxu0 0
        %1856 = vmatmul.mubr.bf16.gmra.mrb[0].mxu0 %v1818
        %v1857 = vpop.f32.mrb[0].mxu0
        %v1858 = vadd.f32 0.0, %v1857
        %v1859 = vpop.f32.mrb[0].mxu0
        %v1860 = vpop.f32.mrb[0].mxu0
        %v1861 = vadd.f32 0.0, %v1860
        %v1862 = vpop.f32.mrb[0].mxu0
        %1863 = vmatprep.mubr.bf16.mxu0 0
        %1864 = vmatmul.mubr.bf16.gmra.mrb[0].mxu0 %v1821
        %v1865 = vpop.f32.mrb[0].mxu0
        %v1866 = vadd.f32 0.0, %v1865
        %v1867 = vpop.f32.mrb[0].mxu0
        %v1868 = vpop.f32.mrb[0].mxu0
        %v1869 = vadd.f32 0.0, %v1868
        %v1870 = vpop.f32.mrb[0].mxu0
        %1871 = vdwg.mxu0
        %v1872 = vadd.f32 %v1804, %v1858
        %v1873 = vadd.f32 %v1805, %v1861
        %v1874 = vadd.f32 %v1806, %v1866
        %v1875 = vadd.f32 %v1807, %v1869
        %s1876 = scalar_lea.vmem %s531, 3
        %v1877 = vld [vmem:[%s1876] sm:$0x1]
        %s1878 = scalar_lea.vmem %s535, 3
        %v1879 = vld [vmem:[%s1878] sm:$0x1]
        %v1880 = vsel %vm567, %v1872, 0.0
        %v1881 = vsel %vm567, %v1873, 0.0
        %v1882 = vadd.f32 %v1880, %v1881
        %v1883 = vsel %vm567, %v1874, 0.0
        %v1884 = vadd.f32 %v1882, %v1883
        %v1885 = vsel %vm567, %v1875, 0.0
        %v1886 = vadd.f32 %v1884, %v1885
        %v1887 = vrot.slane %v1886, 4
        %v1888 = vadd.f32 %v1886, %v1887
        %v1889 = vrot.slane %v1888, 2
        %v1890 = vadd.f32 %v1888, %v1889
        %v1891 = vrot.slane %v1890, 1
        %v1892 = vadd.f32 %v1890, %v1891
        %v1893 = vmul.f32 %v1892, 0.03125
        %v1894 = vsub.f32 %v1872, %v1893
        %v1895 = vsub.f32 %v1873, %v1893
        %v1896 = vsub.f32 %v1874, %v1893
        %v1897 = vsub.f32 %v1875, %v1893
        %v1898 = vmul.f32 %v1894, %v1894
        %v1899 = vmul.f32 %v1895, %v1895
        %v1900 = vmul.f32 %v1896, %v1896
        %v1901 = vmul.f32 %v1897, %v1897
        %v1902 = vsel %vm567, %v1898, 0.0
        %v1903 = vsel %vm567, %v1899, 0.0
        %v1904 = vadd.f32 %v1902, %v1903
        %v1905 = vsel %vm567, %v1900, 0.0
        %v1906 = vadd.f32 %v1904, %v1905
        %v1907 = vsel %vm567, %v1901, 0.0
        %v1908 = vadd.f32 %v1906, %v1907
        %v1909 = vrot.slane %v1908, 4
        %v1910 = vadd.f32 %v1908, %v1909
        %v1911 = vrot.slane %v1910, 2
        %v1912 = vadd.f32 %v1910, %v1911
        %v1913 = vrot.slane %v1912, 1
        %v1914 = vadd.f32 %v1912, %v1913
        %v1915 = vmul.f32 %v1914, 0.03125
        %v1916 = vadd.f32 %v1915, 1e-05
        %v1917 = vrsqrt.pop %v1916
        %v1918 = vmul.f32 %v1917, %v1877
        %v1919 = vlaneseq
        %v1920 = vshrl.u32 %v1919, 7
        %v1921 = vsub.s32 0, %v1920
        %v1922 = vrot.slane %v1918, %v1921
        %v1923 = vmul.f32 %v1894, %v1922
        %v1924 = vmul.f32 %v1895, %v1922
        %v1925 = vmul.f32 %v1896, %v1922
        %v1926 = vmul.f32 %v1897, %v1922
        %v1928 = vlaneseq
        %v1929 = vshrl.u32 %v1928, 7
        %v1930 = vsub.s32 0, %v1929
        %v1931 = vrot.slane %v1879, %v1930
        %v1933 = vadd.f32 %v1923, %v1931
        %v1934 = vadd.f32 %v1924, %v1931
        %v1935 = vadd.f32 %v1925, %v1931
        %v1936 = vadd.f32 %v1926, %v1931
        %v1937 = vadd.f32 %v1933, %v1271
        %v1938 = vadd.f32 %v1934, %v1272
        %v1939 = vadd.f32 %v1935, %v1273
        %v1940 = vadd.f32 %v1936, %v1274
        %v1941 = vmax.f32 %v1937, 0.0
        %v1942 = vmax.f32 %v1938, 0.0
        %v1943 = vmax.f32 %v1939, 0.0
        %v1944 = vmax.f32 %v1940, 0.0
        %s1945 = scalar_lea.vmem %s539, 1
        %v1946 = vld [vmem:[%s1945] sm:$0x1]
        %s1947 = scalar_lea.vmem %s543, 1
        %v1948 = vld [vmem:[%s1947] sm:$0x1]
        %v1949 = vsel %vm567, %v1941, 0.0
        %v1950 = vsel %vm567, %v1942, 0.0
        %v1951 = vadd.f32 %v1949, %v1950
        %v1952 = vsel %vm567, %v1943, 0.0
        %v1953 = vadd.f32 %v1951, %v1952
        %v1954 = vsel %vm567, %v1944, 0.0
        %v1955 = vadd.f32 %v1953, %v1954
        %v1956 = vrot.slane %v1955, 4
        %v1957 = vadd.f32 %v1955, %v1956
        %v1958 = vrot.slane %v1957, 2
        %v1959 = vadd.f32 %v1957, %v1958
        %v1960 = vrot.slane %v1959, 1
        %v1961 = vadd.f32 %v1959, %v1960
        %v1962 = vmul.f32 %v1961, 0.03125
        %v1963 = vsub.f32 %v1941, %v1962
        %v1964 = vsub.f32 %v1942, %v1962
        %v1965 = vsub.f32 %v1943, %v1962
        %v1966 = vsub.f32 %v1944, %v1962
        %v1967 = vmul.f32 %v1963, %v1963
        %v1968 = vmul.f32 %v1964, %v1964
        %v1969 = vmul.f32 %v1965, %v1965
        %v1970 = vmul.f32 %v1966, %v1966
        %v1971 = vsel %vm567, %v1967, 0.0
        %v1972 = vsel %vm567, %v1968, 0.0
        %v1973 = vadd.f32 %v1971, %v1972
        %v1974 = vsel %vm567, %v1969, 0.0
        %v1975 = vadd.f32 %v1973, %v1974
        %v1976 = vsel %vm567, %v1970, 0.0
        %v1977 = vadd.f32 %v1975, %v1976
        %v1978 = vrot.slane %v1977, 4
        %v1979 = vadd.f32 %v1977, %v1978
        %v1980 = vrot.slane %v1979, 2
        %v1981 = vadd.f32 %v1979, %v1980
        %v1982 = vrot.slane %v1981, 1
        %v1983 = vadd.f32 %v1981, %v1982
        %v1984 = vmul.f32 %v1983, 0.03125
        %v1985 = vadd.f32 %v1984, 1e-05
        %v1986 = vrsqrt.pop %v1985
        %v1987 = vmul.f32 %v1986, %v1946
        %v1988 = vlaneseq
        %v1989 = vshrl.u32 %v1988, 7
        %v1990 = vsub.s32 0, %v1989
        %v1991 = vrot.slane %v1987, %v1990
        %v1992 = vmul.f32 %v1963, %v1991
        %v1993 = vmul.f32 %v1964, %v1991
        %v1994 = vmul.f32 %v1965, %v1991
        %v1995 = vmul.f32 %v1966, %v1991
        %v1997 = vlaneseq
        %v1998 = vshrl.u32 %v1997, 7
        %v1999 = vsub.s32 0, %v1998
        %v2000 = vrot.slane %v1948, %v1999
        %v2002 = vadd.f32 %v1992, %v2000
        %v2003 = vadd.f32 %v1993, %v2000
        %v2004 = vadd.f32 %v1994, %v2000
        %v2005 = vadd.f32 %v1995, %v2000
        %v2006 = vsel %vm567, %v2002, -inf
        %v2007 = vsel %vm567, %v2003, -inf
        %v2008 = vmax.f32 %v2006, %v2007
        %v2009 = vrot.slane %v2008, 4
        %v2010 = vmax.f32 %v2008, %v2009
        %v2011 = vrot.slane %v2010, 2
        %v2012 = vmax.f32 %v2010, %v2011
        %v2013 = vrot.slane %v2012, 1
        %v2014 = vmax.f32 %v2012, %v2013
        %v2015 = vsel %vm567, %v2004, -inf
        %v2016 = vsel %vm567, %v2005, -inf
        %v2017 = vmax.f32 %v2015, %v2016
        %v2018 = vrot.slane %v2017, 4
        %v2019 = vmax.f32 %v2017, %v2018
        %v2020 = vrot.slane %v2019, 2
        %v2021 = vmax.f32 %v2019, %v2020
        %v2022 = vrot.slane %v2021, 1
        %v2023 = vmax.f32 %v2021, %v2022
        %v2026 = vsel %vm1354, %v2023, %v2014
        %s2028 = scalar_lea.vmem %s524, 2 [#allocation10]
        %2029 = vst.msk [vmem:[%s2028] sm:$0x3] %vm1357, %v2026
        %s2030 = sand.u32 %s274, 1
        %s2031 = scalar_lea.sflag [#allocation4], %s2030
        %s2032 = sand.u32 %s274, 1
        %s2033 = smul.addr %s2032, 4
        %s2034 = scalar_lea.vmem [#allocation10], %s2033
        // Predicated region
        $region73: #{tpu_custom_call.1} parent=55 // pred_check
          %p2035 = pneg %p284
        $region74: #{tpu_custom_call.1} parent=55 // pred_check_branch
          %2037 = sbr.rel (%p2035) target = $region76
        $region75: #{tpu_custom_call.1} parent=55 // pred_region
          %s2039 = ssub.s32 64, 64
          %2040 = vsyncadd %s2031, %s2039
          %s2041 = smul.addr %s32, 2
          %s2042 = smul.addr %s2041, 32
          %s2043 = scalar_lea.hbm %s9, %s2042
          %s2044 = sshll.u32 %s2034, 4
          %s2045 = int_to_ptr.vmem [resolvable:$true] %s2044
          %2050 = dma.vmem_to_hbm [thread:$0]  %s2045, 64, %s2043, %s2031, 32, 32, 2
        $region76: #{tpu_custom_call.1} parent=55 // pred_fallthru
          _
      $region56: #{tpu_custom_call.1} parent=5 // pred_fallthru
        _
      %p2051 = scmp.le.s32.totalorder 2, %s27
      // Predicated region
      $region77: #{tpu_custom_call.1} parent=5 // pred_check
        %p2052 = pneg %p2051
      $region78: #{tpu_custom_call.1} parent=5 // pred_check_branch
        %2054 = sbr.rel (%p2052) target = $region80
      $region79: #{tpu_custom_call.1} parent=5 // pred_region
        %s2055 = ssub.s32 %s27, 2
        // Predicated region
        $region81: #{tpu_custom_call.1} parent=79 // pred_check
          %p2056 = pneg %p290
        $region82: #{tpu_custom_call.1} parent=79 // pred_check_branch
          %2058 = sbr.rel (%p2056) target = $region84
        $region83: #{tpu_custom_call.1} parent=79 // pred_region
          %s2059 = sand.u32 %s275, 1
          %s2060 = scalar_lea.sflag [#allocation4], %s2059
          %s2061 = sand.u32 %s275, 1
          %s2062 = smul.addr %s2061, 4
          %s2063 = scalar_lea.vmem [#allocation10], %s2062
          %2064 = dma.done %s2060, 64
        $region84: #{tpu_custom_call.1} parent=79 // pred_fallthru
          _
      $region80: #{tpu_custom_call.1} parent=5 // pred_fallthru
        _
    $region6: #{tpu_custom_call.1} parent=1 // loop_footer
      %s31 = sadd.s32 1, %s27
    $region7: #{tpu_custom_call.1} parent=1 // loop_footer_branch
      %26 = sbr.rel target = $region3
    $region8: #{tpu_custom_call.1} parent=1 // loop_exit
      _
    %2065 = vsyncpa [#allocation3], 1
    %s2066 = scalar_lea.sflag [#allocation3], 1
    %2067 = vsyncpa %s2066, 1
    %2068 = vsyncpa [#allocation6], 1
    %s2069 = scalar_lea.sflag [#allocation6], 1
    %2070 = vsyncpa %s2069, 1
    %2071 = vsyncpa [#allocation9], 1
    %s2072 = scalar_lea.sflag [#allocation9], 1
    %2073 = vsyncpa %s2072, 1
    %2074 = vsyncpa [#allocation4], 1
    %s2075 = scalar_lea.sflag [#allocation4], 1
    %2076 = vsyncpa %s2075, 1

</llo_original>
